<compile_context>
chip_gen: v6e
topology: v6e:2x2x1
jax: 0.10.0
libtpu: 0.0.40
codegen_flags: <defaults>
</compile_context>

<pallas_src>
import jax
import jax.numpy as jnp
from jax import lax
from jax.experimental import pallas as pl
from jax.experimental.pallas import tpu as pltpu

_LANES = 128
_BIG_NEG = -1e30  # Python float -> trace literal, never a captured constant.


def _round_up(x, m):
    return (x + m - 1) // m * m


def _make_kernel(n_valid, n_pad, tr, tc, shift, use_online_max):
    """n_valid/n_pad/tr/tc: Python ints; shift = 1/temperature (Python float)."""
    has_pad = n_valid < n_pad

    def kernel(q_ref, kT_ref, lab_r_ref, lab_c_ref, o_ref, *scratch):
        if use_online_max:
            m_sc, l_sc, pos_sc, cnt_sc = scratch
        else:
            l_sc, pos_sc, cnt_sc = scratch

        i = pl.program_id(0)        # row block ("parallel")
        kv = pl.program_id(1)       # column block (reduction axis, last)
        n_kv = pl.num_programs(1)

        @pl.when(kv == 0)
        def _init():
            if use_online_max:
                m_sc[...] = jnp.full(m_sc.shape, _BIG_NEG, jnp.float32)
            l_sc[...] = jnp.zeros_like(l_sc)
            pos_sc[...] = jnp.zeros_like(pos_sc)
            cnt_sc[...] = jnp.zeros_like(cnt_sc)

        # (TR, TC) similarity tile on the MXU; 1/T already folded into q, so
        # s[j,k] == cos(v_j, v_k) / T (bf16 operands, f32 accumulation).
        s = jnp.dot(q_ref[...], kT_ref[...], preferred_element_type=jnp.float32)

        lab_eq = lab_r_ref[...] == lab_c_ref[...]          # (TR, TC) bool

        def masked_quantities():
            # Exclude the diagonal and padded columns from both the logsumexp
            # and the same-sense positives, using per-tile iotas only.
            row_g = i * tr + lax.broadcasted_iota(jnp.int32, (tr, tc), 0)
            col_g = kv * tc + lax.broadcasted_iota(jnp.int32, (tr, tc), 1)
            keep = (row_g != col_g) & (col_g < n_valid)
            same_f = (lab_eq & keep).astype(jnp.float32)
            return jnp.where(keep, s, _BIG_NEG), same_f

        if use_online_max:
            # Tiny-temperature fallback: flash-style online logsumexp with
            # (TR,1) accumulators; masks always applied.
            s_m, same_f = masked_quantities()
            tile_max = jnp.max(s_m, axis=1, keepdims=True)
            m_new = jnp.maximum(m_sc[...], tile_max)
            alpha = jnp.exp(m_sc[...] - m_new)
            l_sc[...] = alpha * l_sc[...] + jnp.sum(
                jnp.exp(s_m - m_new), axis=1, keepdims=True)
            m_sc[...] = m_new
            pos_sc[...] = pos_sc[...] + jnp.sum(s * same_f, axis=1, keepdims=True)
            cnt_sc[...] = cnt_sc[...] + jnp.sum(same_f, axis=1, keepdims=True)
        else:
            # Main path: cos/T is bounded by +-shift, so a fixed shift replaces
            # the online max. Accumulators are per-lane (TR,128): per-tile
            # reductions are VPU lane-block adds only; the cross-lane reduce is
            # deferred to the finalize step.
            def fold(x):                                   # (TR,TC) -> (TR,128)
                acc = x[:, 0:_LANES]
                for g in range(1, tc // _LANES):
                    acc = acc + x[:, g * _LANES:(g + 1) * _LANES]
                return acc

            def update(s_lse, same_f):
                l_sc[...] = l_sc[...] + fold(jnp.exp(s_lse - shift))
                pos_sc[...] = pos_sc[...] + fold(s * same_f)
                cnt_sc[...] = cnt_sc[...] + fold(same_f)

            # Fast path: interior tiles touch neither the diagonal nor padded
            # columns (padding < 128 <= tc lives only in the last kv block), so
            # the iota masks and the big-neg select can be skipped.
            r0 = i * tr
            c0 = kv * tc
            needs_mask = (r0 < c0 + tc) & (c0 < r0 + tr)
            if has_pad:
                needs_mask = needs_mask | (kv == n_kv - 1)

            @pl.when(needs_mask)
            def _masked_update():
                s_m, same_f = masked_quantities()
                update(s_m, same_f)

            @pl.when(jnp.logical_not(needs_mask))
            def _fast_update():
                update(s, lab_eq.astype(jnp.float32))

        @pl.when(kv == n_kv - 1)
        def _finalize():
            if use_online_max:
                lse = jnp.log(l_sc[...]) + m_sc[...]
                cnt = cnt_sc[...]
                pos = pos_sc[...]
            else:
                lse = jnp.log(jnp.sum(l_sc[...], axis=1, keepdims=True)) + shift
                cnt = jnp.sum(cnt_sc[...], axis=1, keepdims=True)
                pos = jnp.sum(pos_sc[...], axis=1, keepdims=True)
            has_pos = cnt > 0.0
            pos_mean = pos / jnp.where(has_pos, cnt, 1.0)
            row_ids = i * tr + lax.broadcasted_iota(jnp.int32, (tr, 1), 0)
            row_valid = row_ids < n_valid
            # Rows with no same-sense partner and padded rows contribute 0
            # (the PyTorch "continue" / "no change" branch).
            o_ref[...] = jnp.where(has_pos & row_valid, lse - pos_mean, 0.0)

    return kernel


def _pick_tiles(n_pad, d_pad):
    cands = [t for t in (1024, 512, 256, 128) if n_pad % t == 0]
    # Row tile >=512 keeps the column-operand stream MXU-bound (arithmetic
    # intensity ~ tr flop/byte); prefer an even row-block count for megacore
    # balance when it does not shrink the tile below 512.
    tr = cands[0]
    for t in cands:
        if t >= 512 and (n_pad // t) % 2 == 0:
            tr = t
            break
    tc = next(t for t in (512, 256, 128) if n_pad % t == 0)

    def vmem_estimate(tr_, tc_):
        operands = 2 * 2 * (tr_ * d_pad + d_pad * tc_)   # bf16 q/kT, double buffered
        labels = 2 * 2 * 4 * (tr_ + tc_)
        scratch = 3 * 4 * tr_ * _LANES
        out = 2 * 4 * tr_
        temps = 8 * 4 * tr_ * tc_                        # f32 (TR,TC) elementwise chain
        return operands + labels + scratch + out + temps

    budget = 40 * 1024 * 1024  # leaves headroom on v7x's 64 MiB/TC
    while vmem_estimate(tr, tc) > budget and tc > 128:
        tc //= 2
    while vmem_estimate(tr, tc) > budget and tr > 128:
        tr //= 2
    return tr, tc, vmem_estimate(tr, tc)


def sense_contrast_loss(vectors, labels, temperature=1.0):
    """vectors: (N, D) float, labels: (N,) int -> scalar float32 loss."""
    v = vectors.astype(jnp.float32)
    labels = labels.astype(jnp.int32)
    n, d = v.shape

    inv_temp = 1.0 / float(temperature)
    # Cosine normalization (== torch F.normalize with eps=1e-12); 1/T is folded
    # into the row operand here, so the kernel's MXU output is already cos/T.
    sumsq = jnp.sum(v * v, axis=1, keepdims=True)
    inv_norm = lax.rsqrt(jnp.maximum(sumsq, 1e-24))
    q = v * (inv_norm * inv_temp)
    k = v * inv_norm

    n_pad = _round_up(n, 128)
    d_pad = _round_up(d, 128)
    tr, tc, vmem_est = _pick_tiles(n_pad, d_pad)

    # bf16 MXU operands; column operand pre-transposed once in the wrapper
    # (no per-tile XLU transpose). Padding is zero.
    q_p = (jnp.zeros((n_pad, d_pad), jnp.float32)
           .at[:n, :d].set(q).astype(jnp.bfloat16))
    kT_p = (jnp.zeros((n_pad, d_pad), jnp.float32)
            .at[:n, :d].set(k).astype(jnp.bfloat16)).T          # (d_pad, n_pad)
    lab_rows = jnp.zeros((n_pad, 1), jnp.int32).at[:n, 0].set(labels)
    lab_cols = jnp.zeros((1, n_pad), jnp.int32).at[0, :n].set(labels)

    grid = (n_pad // tr, n_pad // tc)

    # cos/T is bounded by +-1/T: fixed logsumexp shift unless T is tiny enough
    # that exp(-2/T) would underflow f32.
    use_online_max = (2.0 * inv_temp) > 60.0
    if use_online_max:
        scratch_shapes = [pltpu.VMEM((tr, 1), jnp.float32)] * 4
    else:
        scratch_shapes = [pltpu.VMEM((tr, _LANES), jnp.float32)] * 3

    flops = 2 * n_pad * n_pad * d_pad
    transcendentals = n_pad * n_pad
    bytes_accessed = (n_pad * d_pad * 2                # q row tiles: fetched once total
                      + n_pad * d_pad * 2 * grid[0]    # kT: re-streamed per row block
                      + n_pad * 4 * 3)                 # labels + per-row output

    vmem_limit = int(min(56 * 1024 * 1024,
                         max(16 * 1024 * 1024, vmem_est + 8 * 1024 * 1024)))

    per_row = pl.pallas_call(
        _make_kernel(n, n_pad, tr, tc, inv_temp, use_online_max),
        out_shape=jax.ShapeDtypeStruct((n_pad, 1), jnp.float32),
        grid_spec=pltpu.PrefetchScalarGridSpec(
            num_scalar_prefetch=0,
            grid=grid,
            in_specs=[
                pl.BlockSpec((tr, d_pad), lambda i, kv: (i, 0)),    # row tile
                pl.BlockSpec((d_pad, tc), lambda i, kv: (0, kv)),   # col tile (pre-T)
                pl.BlockSpec((tr, 1), lambda i, kv: (i, 0)),        # row labels
                pl.BlockSpec((1, tc), lambda i, kv: (0, kv)),       # col labels
            ],
            out_specs=pl.BlockSpec((tr, 1), lambda i, kv: (i, 0)),
            scratch_shapes=scratch_shapes,
        ),
        compiler_params=pltpu.CompilerParams(
            dimension_semantics=("parallel", "arbitrary"),
            vmem_limit_bytes=vmem_limit,
        ),
        cost_estimate=pl.CostEstimate(
            flops=flops,
            transcendentals=transcendentals,
            bytes_accessed=bytes_accessed,
        ),
    )(q_p, kT_p, lab_rows, lab_cols)

    return jnp.sum(per_row)


def _reference_loss(vectors, labels, temperature=1.0):
    """Pure-JAX reference mirroring the PyTorch loop (bf16 MXU precision)."""
    v = vectors.astype(jnp.float32)
    vn = v * lax.rsqrt(jnp.maximum(jnp.sum(v * v, axis=1, keepdims=True), 1e-24))
    inv_t = 1.0 / float(temperature)
    a = (vn * inv_t).astype(jnp.bfloat16)
    b = vn.astype(jnp.bfloat16)
    sim = jnp.dot(a, b.T, preferred_element_type=jnp.float32).astype(jnp.float32)
    n = v.shape[0]
    eye = jnp.eye(n, dtype=bool)
    sim_off = jnp.where(eye, -jnp.inf, sim)
    lse = jax.scipy.special.logsumexp(sim_off, axis=1)
    same = (labels[:, None] == labels[None, :]) & (~eye)
    cnt = same.sum(axis=1)
    pos_mean = (jnp.where(same, sim, 0.0).sum(axis=1)
                / jnp.where(cnt > 0, cnt, 1).astype(jnp.float32))
    return jnp.sum(jnp.where(cnt > 0, lse - pos_mean, 0.0))


if __name__ == "__main__":
    key = jax.random.PRNGKey(0)
    kv_key, kl_key = jax.random.split(key)
    N, D = 8, 32
    vectors = jax.random.normal(kv_key, (N, D), dtype=jnp.float32)
    labels = jax.random.randint(kl_key, (N,), 0, 3, dtype=jnp.int32)

    loss = sense_contrast_loss(vectors, labels, temperature=1.0)
    loss = jax.block_until_ready(loss)

    ref = _reference_loss(vectors, labels, temperature=1.0)
    assert jnp.allclose(loss, ref, rtol=1e-3, atol=1e-3), (loss, ref)
    print("KERNEL_OK")
</pallas_src>

<mosaic_0001>
module attributes {stable_mosaic.version = 11 : i64} {
  func.func @kernel(%arg0: i32, %arg1: i32, %arg2: memref<128x128xbf16, #tpu.memory_space<vmem>>, %arg3: memref<128x128xbf16, #tpu.memory_space<vmem>>, %arg4: memref<128x1xi32, #tpu.memory_space<vmem>>, %arg5: memref<1x128xi32, #tpu.memory_space<vmem>>, %arg6: memref<128x1xf32, #tpu.memory_space<vmem>>, %arg7: memref<128x128xf32, #tpu.memory_space<vmem>>, %arg8: memref<128x128xf32, #tpu.memory_space<vmem>>, %arg9: memref<128x128xf32, #tpu.memory_space<vmem>>) attributes {dimension_semantics = [#tpu.dimension_semantics<parallel>, #tpu.dimension_semantics<arbitrary>], iteration_bounds = array<i64: 1, 1>, scalar_prefetch = 0 : i64, scratch_operands = 3 : i64, tpu.core_type = #tpu.core_type<tc>, window_params = [{transform_indices = @transform_0, window_bounds = array<i64: 128, 128>}, {transform_indices = @transform_1, window_bounds = array<i64: 128, 128>}, {transform_indices = @transform_2, window_bounds = array<i64: 128, 1>}, {transform_indices = @transform_3, window_bounds = array<i64: 1, 128>}, {transform_indices = @transform_4, window_bounds = array<i64: 128, 1>}]} {
    %c0_i32 = arith.constant 0 : i32
    %0 = arith.cmpi eq, %arg1, %c0_i32 : i32
    %1 = arith.extui %0 : i1 to i32
    %c0_i32_0 = arith.constant 0 : i32
    %2 = arith.cmpi ne, %1, %c0_i32_0 : i32
    scf.if %2 {
      %cst_16 = arith.constant 0.000000e+00 : f32
      %28 = vector.broadcast %cst_16 : f32 to vector<128x128xf32>
      %c0_17 = arith.constant 0 : index
      %c0_18 = arith.constant 0 : index
      %29 = vector.load %arg7[%c0_17, %c0_18] : memref<128x128xf32, #tpu.memory_space<vmem>>, vector<128x128xf32>
      tpu.vector_store %arg7[%c0_17, %c0_18], %28 {strides = array<i32>} : memref<128x128xf32, #tpu.memory_space<vmem>>, vector<128x128xf32>,
      %cst_19 = arith.constant 0.000000e+00 : f32
      %30 = vector.broadcast %cst_19 : f32 to vector<128x128xf32>
      %c0_20 = arith.constant 0 : index
      %c0_21 = arith.constant 0 : index
      %31 = vector.load %arg8[%c0_20, %c0_21] : memref<128x128xf32, #tpu.memory_space<vmem>>, vector<128x128xf32>
      tpu.vector_store %arg8[%c0_20, %c0_21], %30 {strides = array<i32>} : memref<128x128xf32, #tpu.memory_space<vmem>>, vector<128x128xf32>,
      %cst_22 = arith.constant 0.000000e+00 : f32
      %32 = vector.broadcast %cst_22 : f32 to vector<128x128xf32>
      %c0_23 = arith.constant 0 : index
      %c0_24 = arith.constant 0 : index
      %33 = vector.load %arg9[%c0_23, %c0_24] : memref<128x128xf32, #tpu.memory_space<vmem>>, vector<128x128xf32>
      tpu.vector_store %arg9[%c0_23, %c0_24], %32 {strides = array<i32>} : memref<128x128xf32, #tpu.memory_space<vmem>>, vector<128x128xf32>,
    } else {
    }
    %c0 = arith.constant 0 : index
    %c0_1 = arith.constant 0 : index
    %3 = vector.load %arg2[%c0, %c0_1] : memref<128x128xbf16, #tpu.memory_space<vmem>>, vector<128x128xbf16>
    %c0_2 = arith.constant 0 : index
    %c0_3 = arith.constant 0 : index
    %4 = vector.load %arg3[%c0_2, %c0_3] : memref<128x128xbf16, #tpu.memory_space<vmem>>, vector<128x128xbf16>
    %cst = arith.constant dense<0.000000e+00> : vector<128x128xf32>
    %5 = tpu.matmul %3, %4, %cst {dimension_numbers = #tpu.dot_dimension_numbers<[1], [0], [0], [1], [0, 0, 1, 1], [], []>} : vector<128x128xbf16>, vector<128x128xbf16>, vector<128x128xf32> -> vector<128x128xf32>
    %c0_4 = arith.constant 0 : index
    %c0_5 = arith.constant 0 : index
    %6 = vector.load %arg4[%c0_4, %c0_5] : memref<128x1xi32, #tpu.memory_space<vmem>>, vector<128x1xi32>
    %c0_6 = arith.constant 0 : index
    %c0_7 = arith.constant 0 : index
    %7 = vector.load %arg5[%c0_6, %c0_7] : memref<1x128xi32, #tpu.memory_space<vmem>>, vector<1x128xi32>
    %8 = vector.broadcast %6 : vector<128x1xi32> to vector<128x128xi32>
    %9 = vector.broadcast %7 : vector<1x128xi32> to vector<128x128xi32>
    %10 = arith.cmpi eq, %8, %9 : vector<128x128xi32>
    %c128_i32 = arith.constant 128 : i32
    %11 = arith.muli %arg0, %c128_i32 : i32
    %c128_i32_8 = arith.constant 128 : i32
    %12 = arith.muli %arg1, %c128_i32_8 : i32
    %c128_i32_9 = arith.constant 128 : i32
    %13 = arith.addi %12, %c128_i32_9 : i32
    %14 = arith.cmpi slt, %11, %13 : i32
    %c128_i32_10 = arith.constant 128 : i32
    %15 = arith.addi %11, %c128_i32_10 : i32
    %16 = arith.cmpi slt, %12, %15 : i32
    %17 = arith.andi %14, %16 : i1
    %c0_i32_11 = arith.constant 0 : i32
    %18 = arith.cmpi eq, %arg1, %c0_i32_11 : i32
    %19 = arith.ori %17, %18 : i1
    %20 = arith.extui %19 : i1 to i32
    %c0_i32_12 = arith.constant 0 : i32
    %21 = arith.cmpi ne, %20, %c0_i32_12 : i32
    scf.if %21 {
      %c128_i32_16 = arith.constant 128 : i32
      %28 = arith.muli %arg0, %c128_i32_16 : i32
      %29 = tpu.iota {dimensions = array<i32: 0>} : vector<128x128xi32>
      %30 = vector.broadcast %28 : i32 to vector<128x128xi32>
      %31 = arith.addi %30, %29 : vector<128x128xi32>
      %c128_i32_17 = arith.constant 128 : i32
      %32 = arith.muli %arg1, %c128_i32_17 : i32
      %33 = tpu.iota {dimensions = array<i32: 1>} : vector<128x128xi32>
      %34 = vector.broadcast %32 : i32 to vector<128x128xi32>
      %35 = arith.addi %34, %33 : vector<128x128xi32>
      %36 = arith.cmpi ne, %31, %35 : vector<128x128xi32>
      %c8_i32 = arith.constant 8 : i32
      %37 = vector.broadcast %c8_i32 : i32 to vector<128x128xi32>
      %38 = arith.cmpi slt, %35, %37 : vector<128x128xi32>
      %39 = arith.andi %36, %38 : vector<128x128xi1>
      %40 = arith.andi %10, %39 : vector<128x128xi1>
      %41 = arith.extui %40 : vector<128x128xi1> to vector<128x128xi32>
      %42 = arith.sitofp %41 : vector<128x128xi32> to vector<128x128xf32>
      %cst_18 = arith.constant -1.000000e+30 : f32
      %43 = vector.broadcast %cst_18 : f32 to vector<128x128xf32>
      %44 = arith.select %39, %5, %43 : vector<128x128xi1>, vector<128x128xf32>
      %c0_19 = arith.constant 0 : index
      %c0_20 = arith.constant 0 : index
      %45 = vector.load %arg7[%c0_19, %c0_20] : memref<128x128xf32, #tpu.memory_space<vmem>>, vector<128x128xf32>
      %cst_21 = arith.constant 1.000000e+00 : f32
      %46 = vector.broadcast %cst_21 : f32 to vector<128x128xf32>
      %47 = arith.subf %44, %46 : vector<128x128xf32>
      %48 = math.exp %47 : vector<128x128xf32>
      %49 = arith.addf %45, %48 : vector<128x128xf32>
      %c0_22 = arith.constant 0 : index
      %c0_23 = arith.constant 0 : index
      %50 = vector.load %arg7[%c0_22, %c0_23] : memref<128x128xf32, #tpu.memory_space<vmem>>, vector<128x128xf32>
      tpu.vector_store %arg7[%c0_22, %c0_23], %49 {strides = array<i32>} : memref<128x128xf32, #tpu.memory_space<vmem>>, vector<128x128xf32>,
      %c0_24 = arith.constant 0 : index
      %c0_25 = arith.constant 0 : index
      %51 = vector.load %arg8[%c0_24, %c0_25] : memref<128x128xf32, #tpu.memory_space<vmem>>, vector<128x128xf32>
      %52 = arith.mulf %5, %42 : vector<128x128xf32>
      %53 = arith.addf %51, %52 : vector<128x128xf32>
      %c0_26 = arith.constant 0 : index
      %c0_27 = arith.constant 0 : index
      %54 = vector.load %arg8[%c0_26, %c0_27] : memref<128x128xf32, #tpu.memory_space<vmem>>, vector<128x128xf32>
      tpu.vector_store %arg8[%c0_26, %c0_27], %53 {strides = array<i32>} : memref<128x128xf32, #tpu.memory_space<vmem>>, vector<128x128xf32>,
      %c0_28 = arith.constant 0 : index
      %c0_29 = arith.constant 0 : index
      %55 = vector.load %arg9[%c0_28, %c0_29] : memref<128x128xf32, #tpu.memory_space<vmem>>, vector<128x128xf32>
      %56 = arith.addf %55, %42 : vector<128x128xf32>
      %c0_30 = arith.constant 0 : index
      %c0_31 = arith.constant 0 : index
      %57 = vector.load %arg9[%c0_30, %c0_31] : memref<128x128xf32, #tpu.memory_space<vmem>>, vector<128x128xf32>
      tpu.vector_store %arg9[%c0_30, %c0_31], %56 {strides = array<i32>} : memref<128x128xf32, #tpu.memory_space<vmem>>, vector<128x128xf32>,
    } else {
    }
    %true = arith.constant true
    %22 = arith.xori %19, %true : i1
    %23 = arith.extui %22 : i1 to i32
    %c0_i32_13 = arith.constant 0 : i32
    %24 = arith.cmpi ne, %23, %c0_i32_13 : i32
    scf.if %24 {
      %28 = arith.extui %10 : vector<128x128xi1> to vector<128x128xi32>
      %29 = arith.sitofp %28 : vector<128x128xi32> to vector<128x128xf32>
      %c0_16 = arith.constant 0 : index
      %c0_17 = arith.constant 0 : index
      %30 = vector.load %arg7[%c0_16, %c0_17] : memref<128x128xf32, #tpu.memory_space<vmem>>, vector<128x128xf32>
      %cst_18 = arith.constant 1.000000e+00 : f32
      %31 = vector.broadcast %cst_18 : f32 to vector<128x128xf32>
      %32 = arith.subf %5, %31 : vector<128x128xf32>
      %33 = math.exp %32 : vector<128x128xf32>
      %34 = arith.addf %30, %33 : vector<128x128xf32>
      %c0_19 = arith.constant 0 : index
      %c0_20 = arith.constant 0 : index
      %35 = vector.load %arg7[%c0_19, %c0_20] : memref<128x128xf32, #tpu.memory_space<vmem>>, vector<128x128xf32>
      tpu.vector_store %arg7[%c0_19, %c0_20], %34 {strides = array<i32>} : memref<128x128xf32, #tpu.memory_space<vmem>>, vector<128x128xf32>,
      %c0_21 = arith.constant 0 : index
      %c0_22 = arith.constant 0 : index
      %36 = vector.load %arg8[%c0_21, %c0_22] : memref<128x128xf32, #tpu.memory_space<vmem>>, vector<128x128xf32>
      %37 = arith.mulf %5, %29 : vector<128x128xf32>
      %38 = arith.addf %36, %37 : vector<128x128xf32>
      %c0_23 = arith.constant 0 : index
      %c0_24 = arith.constant 0 : index
      %39 = vector.load %arg8[%c0_23, %c0_24] : memref<128x128xf32, #tpu.memory_space<vmem>>, vector<128x128xf32>
      tpu.vector_store %arg8[%c0_23, %c0_24], %38 {strides = array<i32>} : memref<128x128xf32, #tpu.memory_space<vmem>>, vector<128x128xf32>,
      %c0_25 = arith.constant 0 : index
      %c0_26 = arith.constant 0 : index
      %40 = vector.load %arg9[%c0_25, %c0_26] : memref<128x128xf32, #tpu.memory_space<vmem>>, vector<128x128xf32>
      %41 = arith.addf %40, %29 : vector<128x128xf32>
      %c0_27 = arith.constant 0 : index
      %c0_28 = arith.constant 0 : index
      %42 = vector.load %arg9[%c0_27, %c0_28] : memref<128x128xf32, #tpu.memory_space<vmem>>, vector<128x128xf32>
      tpu.vector_store %arg9[%c0_27, %c0_28], %41 {strides = array<i32>} : memref<128x128xf32, #tpu.memory_space<vmem>>, vector<128x128xf32>,
    } else {
    }
    %c0_i32_14 = arith.constant 0 : i32
    %25 = arith.cmpi eq, %arg1, %c0_i32_14 : i32
    %26 = arith.extui %25 : i1 to i32
    %c0_i32_15 = arith.constant 0 : i32
    %27 = arith.cmpi ne, %26, %c0_i32_15 : i32
    scf.if %27 {
      %c0_16 = arith.constant 0 : index
      %c0_17 = arith.constant 0 : index
      %28 = vector.load %arg7[%c0_16, %c0_17] : memref<128x128xf32, #tpu.memory_space<vmem>>, vector<128x128xf32>
      %cst_18 = arith.constant dense<0.000000e+00> : vector<128xf32>
      %29 = vector.multi_reduction <add>, %28, %cst_18 [1] : vector<128x128xf32> to vector<128xf32>
      %30 = vector.shape_cast %29 : vector<128xf32> to vector<128x1xf32>
      %31 = math.log %30 : vector<128x1xf32>
      %cst_19 = arith.constant 1.000000e+00 : f32
      %32 = vector.broadcast %cst_19 : f32 to vector<128x1xf32>
      %33 = arith.addf %31, %32 : vector<128x1xf32>
      %c0_20 = arith.constant 0 : index
      %c0_21 = arith.constant 0 : index
      %34 = vector.load %arg9[%c0_20, %c0_21] : memref<128x128xf32, #tpu.memory_space<vmem>>, vector<128x128xf32>
      %cst_22 = arith.constant dense<0.000000e+00> : vector<128xf32>
      %35 = vector.multi_reduction <add>, %34, %cst_22 [1] : vector<128x128xf32> to vector<128xf32>
      %36 = vector.shape_cast %35 : vector<128xf32> to vector<128x1xf32>
      %c0_23 = arith.constant 0 : index
      %c0_24 = arith.constant 0 : index
      %37 = vector.load %arg8[%c0_23, %c0_24] : memref<128x128xf32, #tpu.memory_space<vmem>>, vector<128x128xf32>
      %cst_25 = arith.constant dense<0.000000e+00> : vector<128xf32>
      %38 = vector.multi_reduction <add>, %37, %cst_25 [1] : vector<128x128xf32> to vector<128xf32>
      %39 = vector.shape_cast %38 : vector<128xf32> to vector<128x1xf32>
      %cst_26 = arith.constant 0.000000e+00 : f32
      %40 = vector.broadcast %cst_26 : f32 to vector<128x1xf32>
      %41 = arith.cmpf ogt, %36, %40 : vector<128x1xf32>
      %cst_27 = arith.constant 1.000000e+00 : f32
      %42 = vector.broadcast %cst_27 : f32 to vector<128x1xf32>
      %43 = arith.select %41, %36, %42 : vector<128x1xi1>, vector<128x1xf32>
      %44 = arith.divf %39, %43 : vector<128x1xf32>
      %c128_i32_28 = arith.constant 128 : i32
      %45 = arith.muli %arg0, %c128_i32_28 : i32
      %46 = tpu.iota {dimensions = array<i32: 0>} : vector<128x1xi32>
      %47 = vector.broadcast %45 : i32 to vector<128x1xi32>
      %48 = arith.addi %47, %46 : vector<128x1xi32>
      %c8_i32 = arith.constant 8 : i32
      %49 = vector.broadcast %c8_i32 : i32 to vector<128x1xi32>
      %50 = arith.cmpi slt, %48, %49 : vector<128x1xi32>
      %51 = arith.andi %41, %50 : vector<128x1xi1>
      %52 = arith.subf %33, %44 : vector<128x1xf32>
      %cst_29 = arith.constant 0.000000e+00 : f32
      %53 = vector.broadcast %cst_29 : f32 to vector<128x1xf32>
      %54 = arith.select %51, %52, %53 : vector<128x1xi1>, vector<128x1xf32>
      %c0_30 = arith.constant 0 : index
      %c0_31 = arith.constant 0 : index
      %55 = vector.load %arg6[%c0_30, %c0_31] : memref<128x1xf32, #tpu.memory_space<vmem>>, vector<128x1xf32>
      tpu.vector_store %arg6[%c0_30, %c0_31], %54 {strides = array<i32>} : memref<128x1xf32, #tpu.memory_space<vmem>>, vector<128x1xf32>,
    } else {
    }
    return
  }
  func.func @transform_0(%arg0: i32, %arg1: i32) -> (i32, i32) {
    %c0_i32 = arith.constant 0 : i32
    %c0_i32_0 = arith.constant 0 : i32
    return %arg0, %c0_i32 : i32, i32
  }
  func.func @transform_1(%arg0: i32, %arg1: i32) -> (i32, i32) {
    %c0_i32 = arith.constant 0 : i32
    %c0_i32_0 = arith.constant 0 : i32
    return %c0_i32, %arg1 : i32, i32
  }
  func.func @transform_2(%arg0: i32, %arg1: i32) -> (i32, i32) {
    %c0_i32 = arith.constant 0 : i32
    %c0_i32_0 = arith.constant 0 : i32
    return %arg0, %c0_i32 : i32, i32
  }
  func.func @transform_3(%arg0: i32, %arg1: i32) -> (i32, i32) {
    %c0_i32 = arith.constant 0 : i32
    %c0_i32_0 = arith.constant 0 : i32
    return %c0_i32, %arg1 : i32, i32
  }
  func.func @transform_4(%arg0: i32, %arg1: i32) -> (i32, i32) {
    %c0_i32 = arith.constant 0 : i32
    %c0_i32_0 = arith.constant 0 : i32
    return %arg0, %c0_i32 : i32, i32
  }
}

</mosaic_0001>

<llo_original>
// kernel: tpu_custom_call.1
$region0: #{tpu_custom_call.1}
  #allocation0 [shape = 'u32[]', space=smem, size = 0x4, offset = 0x4, fixed_abs, tag = 'smem constant byte address 0x4 - core index']
  #allocation1 [shape = 'u32[144,128]{1,0:T(1,128)}', space=vmem, size = 0x12000, scoped, tag = 'internal scratch']
  #allocation2 [shape = 'f32[128,128]{1,0:T(8,128)}', space=vmem, size = 0x10000, scoped, tag = 'scratch operand']
  #allocation3 [shape = 'f32[128,128]{1,0:T(8,128)}', space=vmem, size = 0x10000, scoped, tag = 'scratch operand']
  #allocation4 [shape = 'f32[128,128]{1,0:T(8,128)}', space=vmem, size = 0x10000, scoped, tag = 'scratch operand']
  %s0 = inlined_call_operand.vmem [shape: bf16[128,128], index: 0, kind: input, shape index: {}]
  %s1 = inlined_call_operand.vmem [shape: bf16[128,128], index: 1, kind: input, shape index: {}]
  %s2 = inlined_call_operand.vmem [shape: s32[128,1], index: 2, kind: input, shape index: {}]
  %s3 = inlined_call_operand.vmem [shape: s32[1,128], index: 3, kind: input, shape index: {}]
  %s4 = inlined_call_operand.vmem [shape: f32[128,1], index: 4, kind: output, shape index: {}]
  %s5 = sld [smem:[#allocation0]]
  $region42: #{tpu_custom_call.1} parent=0
    _
  %s7 = ssub.s32 1, %s5
  %s8 = scalar_select 0, %s7, %s5
  // Predicated region
  $region2: #{tpu_custom_call.1} parent=0 // pred_check
    _
  $region3: #{tpu_custom_call.1} parent=0 // pred_check_branch
    %10 = sbr.rel (0) target = $region5
  $region4: #{tpu_custom_call.1} parent=0 // pred_region
    _
  $region5: #{tpu_custom_call.1} parent=0 // pred_fallthru
    _
  // Predicated region
  $region6: #{tpu_custom_call.1} parent=0 // pred_check
    _
  $region7: #{tpu_custom_call.1} parent=0 // pred_check_branch
    %12 = sbr.rel (0) target = $region9
  $region8: #{tpu_custom_call.1} parent=0 // pred_region
    _
  $region9: #{tpu_custom_call.1} parent=0 // pred_fallthru
    _
  // Predicated region
  $region10: #{tpu_custom_call.1} parent=0 // pred_check
    _
  $region11: #{tpu_custom_call.1} parent=0 // pred_check_branch
    %14 = sbr.rel (0) target = $region13
  $region12: #{tpu_custom_call.1} parent=0 // pred_region
    _
  $region13: #{tpu_custom_call.1} parent=0 // pred_fallthru
    _
  // Predicated region
  $region14: #{tpu_custom_call.1} parent=0 // pred_check
    _
  $region15: #{tpu_custom_call.1} parent=0 // pred_check_branch
    %16 = sbr.rel (0) target = $region17
  $region16: #{tpu_custom_call.1} parent=0 // pred_region
    _
  $region17: #{tpu_custom_call.1} parent=0 // pred_fallthru
    _
  %p18 = scmp.eq.s32.totalorder 0, 0
  // Predicated region
  $region18: #{tpu_custom_call.1} parent=0 // pred_check
    %p19 = pneg %p18
  $region19: #{tpu_custom_call.1} parent=0 // pred_check_branch
    %21 = sbr.rel (%p19) target = $region21
  $region20: #{tpu_custom_call.1} parent=0 // pred_region
    %22 = vst [vmem:[#allocation2] sm:$0xff] 0.0
    %23 = vst [vmem:[#allocation2 + $0x8] sm:$0xff] 0.0
    %24 = vst [vmem:[#allocation2 + $0x10] sm:$0xff] 0.0
    %25 = vst [vmem:[#allocation2 + $0x18] sm:$0xff] 0.0
    %26 = vst [vmem:[#allocation2 + $0x20] sm:$0xff] 0.0
    %27 = vst [vmem:[#allocation2 + $0x28] sm:$0xff] 0.0
    %28 = vst [vmem:[#allocation2 + $0x30] sm:$0xff] 0.0
    %29 = vst [vmem:[#allocation2 + $0x38] sm:$0xff] 0.0
    %30 = vst [vmem:[#allocation2 + $0x40] sm:$0xff] 0.0
    %31 = vst [vmem:[#allocation2 + $0x48] sm:$0xff] 0.0
    %32 = vst [vmem:[#allocation2 + $0x50] sm:$0xff] 0.0
    %33 = vst [vmem:[#allocation2 + $0x58] sm:$0xff] 0.0
    %34 = vst [vmem:[#allocation2 + $0x60] sm:$0xff] 0.0
    %35 = vst [vmem:[#allocation2 + $0x68] sm:$0xff] 0.0
    %36 = vst [vmem:[#allocation2 + $0x70] sm:$0xff] 0.0
    %37 = vst [vmem:[#allocation2 + $0x78] sm:$0xff] 0.0
    %38 = vst [vmem:[#allocation3] sm:$0xff] 0.0
    %39 = vst [vmem:[#allocation3 + $0x8] sm:$0xff] 0.0
    %40 = vst [vmem:[#allocation3 + $0x10] sm:$0xff] 0.0
    %41 = vst [vmem:[#allocation3 + $0x18] sm:$0xff] 0.0
    %42 = vst [vmem:[#allocation3 + $0x20] sm:$0xff] 0.0
    %43 = vst [vmem:[#allocation3 + $0x28] sm:$0xff] 0.0
    %44 = vst [vmem:[#allocation3 + $0x30] sm:$0xff] 0.0
    %45 = vst [vmem:[#allocation3 + $0x38] sm:$0xff] 0.0
    %46 = vst [vmem:[#allocation3 + $0x40] sm:$0xff] 0.0
    %47 = vst [vmem:[#allocation3 + $0x48] sm:$0xff] 0.0
    %48 = vst [vmem:[#allocation3 + $0x50] sm:$0xff] 0.0
    %49 = vst [vmem:[#allocation3 + $0x58] sm:$0xff] 0.0
    %50 = vst [vmem:[#allocation3 + $0x60] sm:$0xff] 0.0
    %51 = vst [vmem:[#allocation3 + $0x68] sm:$0xff] 0.0
    %52 = vst [vmem:[#allocation3 + $0x70] sm:$0xff] 0.0
    %53 = vst [vmem:[#allocation3 + $0x78] sm:$0xff] 0.0
    %54 = vst [vmem:[#allocation4] sm:$0xff] 0.0
    %55 = vst [vmem:[#allocation4 + $0x8] sm:$0xff] 0.0
    %56 = vst [vmem:[#allocation4 + $0x10] sm:$0xff] 0.0
    %57 = vst [vmem:[#allocation4 + $0x18] sm:$0xff] 0.0
    %58 = vst [vmem:[#allocation4 + $0x20] sm:$0xff] 0.0
    %59 = vst [vmem:[#allocation4 + $0x28] sm:$0xff] 0.0
    %60 = vst [vmem:[#allocation4 + $0x30] sm:$0xff] 0.0
    %61 = vst [vmem:[#allocation4 + $0x38] sm:$0xff] 0.0
    %62 = vst [vmem:[#allocation4 + $0x40] sm:$0xff] 0.0
    %63 = vst [vmem:[#allocation4 + $0x48] sm:$0xff] 0.0
    %64 = vst [vmem:[#allocation4 + $0x50] sm:$0xff] 0.0
    %65 = vst [vmem:[#allocation4 + $0x58] sm:$0xff] 0.0
    %66 = vst [vmem:[#allocation4 + $0x60] sm:$0xff] 0.0
    %67 = vst [vmem:[#allocation4 + $0x68] sm:$0xff] 0.0
    %68 = vst [vmem:[#allocation4 + $0x70] sm:$0xff] 0.0
    %69 = vst [vmem:[#allocation4 + $0x78] sm:$0xff] 0.0
  $region21: #{tpu_custom_call.1} parent=0 // pred_fallthru
    _
  %v70 = vld [vmem:[%s0] sm:$0xf]
  %v71 = vld [vmem:[%s0 + $0x4] sm:$0xf]
  %v72 = vld [vmem:[%s0 + $0x8] sm:$0xf]
  %v73 = vld [vmem:[%s0 + $0xc] sm:$0xf]
  %v74 = vld [vmem:[%s0 + $0x10] sm:$0xf]
  %v75 = vld [vmem:[%s0 + $0x14] sm:$0xf]
  %v76 = vld [vmem:[%s0 + $0x18] sm:$0xf]
  %v77 = vld [vmem:[%s0 + $0x1c] sm:$0xf]
  %v78 = vld [vmem:[%s0 + $0x20] sm:$0xf]
  %v79 = vld [vmem:[%s0 + $0x24] sm:$0xf]
  %v80 = vld [vmem:[%s0 + $0x28] sm:$0xf]
  %v81 = vld [vmem:[%s0 + $0x2c] sm:$0xf]
  %v82 = vld [vmem:[%s0 + $0x30] sm:$0xf]
  %v83 = vld [vmem:[%s0 + $0x34] sm:$0xf]
  %v84 = vld [vmem:[%s0 + $0x38] sm:$0xf]
  %v85 = vld [vmem:[%s0 + $0x3c] sm:$0xf]
  %v86 = vld [vmem:[%s1] sm:$0xf]
  %v87 = vld [vmem:[%s1 + $0x4] sm:$0xf]
  %v88 = vld [vmem:[%s1 + $0x8] sm:$0xf]
  %v89 = vld [vmem:[%s1 + $0xc] sm:$0xf]
  %v90 = vld [vmem:[%s1 + $0x10] sm:$0xf]
  %v91 = vld [vmem:[%s1 + $0x14] sm:$0xf]
  %v92 = vld [vmem:[%s1 + $0x18] sm:$0xf]
  %v93 = vld [vmem:[%s1 + $0x1c] sm:$0xf]
  %v94 = vld [vmem:[%s1 + $0x20] sm:$0xf]
  %v95 = vld [vmem:[%s1 + $0x24] sm:$0xf]
  %v96 = vld [vmem:[%s1 + $0x28] sm:$0xf]
  %v97 = vld [vmem:[%s1 + $0x2c] sm:$0xf]
  %v98 = vld [vmem:[%s1 + $0x30] sm:$0xf]
  %v99 = vld [vmem:[%s1 + $0x34] sm:$0xf]
  %v100 = vld [vmem:[%s1 + $0x38] sm:$0xf]
  %v101 = vld [vmem:[%s1 + $0x3c] sm:$0xf]
  %v118 = vunpack.c.l.b16 %v70
  %v119 = vunpack.c.l.b16 %v71
  %v120 = vunpack.c.l.b16 %v72
  %v121 = vunpack.c.l.b16 %v73
  %v122 = vunpack.c.l.b16 %v74
  %v123 = vunpack.c.l.b16 %v75
  %v124 = vunpack.c.l.b16 %v76
  %v125 = vunpack.c.l.b16 %v77
  %v126 = vunpack.c.l.b16 %v78
  %v127 = vunpack.c.l.b16 %v79
  %v128 = vunpack.c.l.b16 %v80
  %v129 = vunpack.c.l.b16 %v81
  %v130 = vunpack.c.l.b16 %v82
  %v131 = vunpack.c.l.b16 %v83
  %v132 = vunpack.c.l.b16 %v84
  %v133 = vunpack.c.l.b16 %v85
  %v134 = vpack.c.b16 %v119, %v118
  %v135 = vpack.c.b16 %v121, %v120
  %v136 = vpack.c.b16 %v123, %v122
  %v137 = vpack.c.b16 %v125, %v124
  %v138 = vpack.c.b16 %v127, %v126
  %v139 = vpack.c.b16 %v129, %v128
  %v140 = vpack.c.b16 %v131, %v130
  %v141 = vpack.c.b16 %v133, %v132
  %v166 = vunpack.c.l.b16 %v86
  %v167 = vunpack.c.l.b16 %v87
  %v168 = vunpack.c.l.b16 %v88
  %v169 = vunpack.c.l.b16 %v89
  %v170 = vunpack.c.l.b16 %v90
  %v171 = vunpack.c.l.b16 %v91
  %v172 = vunpack.c.l.b16 %v92
  %v173 = vunpack.c.l.b16 %v93
  %v174 = vunpack.c.l.b16 %v94
  %v175 = vunpack.c.l.b16 %v95
  %v176 = vunpack.c.l.b16 %v96
  %v177 = vunpack.c.l.b16 %v97
  %v178 = vunpack.c.l.b16 %v98
  %v179 = vunpack.c.l.b16 %v99
  %v180 = vunpack.c.l.b16 %v100
  %v181 = vunpack.c.l.b16 %v101
  %v182 = vpack.c.b16 %v167, %v166
  %v183 = vpack.c.b16 %v169, %v168
  %v184 = vpack.c.b16 %v171, %v170
  %v185 = vpack.c.b16 %v173, %v172
  %v186 = vpack.c.b16 %v175, %v174
  %v187 = vpack.c.b16 %v177, %v176
  %v188 = vpack.c.b16 %v179, %v178
  %v189 = vpack.c.b16 %v181, %v180
  %198 = vmatprep.subr.bf16.mxu0 0
  %199 = vmatpush1.bf16.msra.mxu0 %v189
  %200 = vmatprep.subr.bf16.mxu0 0
  %201 = vmatpush1.bf16.msra.mxu0 %v188
  %202 = vmatprep.subr.bf16.mxu0 0
  %203 = vmatpush1.bf16.msra.mxu0 %v187
  %204 = vmatprep.subr.bf16.mxu0 0
  %205 = vmatpush1.bf16.msra.mxu0 %v186
  %206 = vmatprep.subr.bf16.mxu0 0
  %207 = vmatpush1.bf16.msra.mxu0 %v185
  %208 = vmatprep.subr.bf16.mxu0 0
  %209 = vmatpush1.bf16.msra.mxu0 %v184
  %210 = vmatprep.subr.bf16.mxu0 0
  %211 = vmatpush1.bf16.msra.mxu0 %v183
  %212 = vmatprep.subr.bf16.mxu0 0
  %213 = vmatpush1.bf16.msra.mxu0 %v182
  %214 = vmatprep.subr.bf16.mxu0 0
  %215 = vmatpush2.bf16.msra.mxu0 0
  %216 = vmatprep.subr.bf16.mxu0 0
  %217 = vmatpush2.bf16.msra.mxu0 0
  %218 = vmatprep.subr.bf16.mxu0 0
  %219 = vmatpush2.bf16.msra.mxu0 0
  %220 = vmatprep.subr.bf16.mxu0 0
  %221 = vmatpush2.bf16.msra.mxu0 0
  %222 = vmatprep.subr.bf16.mxu0 0
  %223 = vmatpush2.bf16.msra.mxu0 0
  %224 = vmatprep.subr.bf16.mxu0 0
  %225 = vmatpush2.bf16.msra.mxu0 0
  %226 = vmatprep.subr.bf16.mxu0 0
  %227 = vmatpush2.bf16.msra.mxu0 0
  %228 = vmatprep.subr.bf16.mxu0 0
  %229 = vmatpush2.bf16.msra.mxu0 0
  %230 = vmatprep.mubr.bf16.mxu0 0
  %231 = vmatmul.mubr.bf16.gmra.mxu0 %v134
  %v232 = vpop.f32.mrf.mxu0
  %v233 = vadd.f32 0.0, %v232
  %v234 = vpop.f32.mrf.mxu0
  %v235 = vpop.f32.mrf.mxu0
  %v236 = vadd.f32 0.0, %v235
  %v237 = vpop.f32.mrf.mxu0
  %238 = vmatprep.mubr.bf16.mxu0 0
  %239 = vmatmul.mubr.bf16.gmra.mxu0 %v135
  %v240 = vpop.f32.mrf.mxu0
  %v241 = vadd.f32 0.0, %v240
  %v242 = vpop.f32.mrf.mxu0
  %v243 = vpop.f32.mrf.mxu0
  %v244 = vadd.f32 0.0, %v243
  %v245 = vpop.f32.mrf.mxu0
  %246 = vmatprep.mubr.bf16.mxu0 0
  %247 = vmatmul.mubr.bf16.gmra.mxu0 %v136
  %v248 = vpop.f32.mrf.mxu0
  %v249 = vadd.f32 0.0, %v248
  %v250 = vpop.f32.mrf.mxu0
  %v251 = vpop.f32.mrf.mxu0
  %v252 = vadd.f32 0.0, %v251
  %v253 = vpop.f32.mrf.mxu0
  %254 = vmatprep.mubr.bf16.mxu0 0
  %255 = vmatmul.mubr.bf16.gmra.mxu0 %v137
  %v256 = vpop.f32.mrf.mxu0
  %v257 = vadd.f32 0.0, %v256
  %v258 = vpop.f32.mrf.mxu0
  %v259 = vpop.f32.mrf.mxu0
  %v260 = vadd.f32 0.0, %v259
  %v261 = vpop.f32.mrf.mxu0
  %262 = vmatprep.mubr.bf16.mxu0 0
  %263 = vmatmul.mubr.bf16.gmra.mxu0 %v138
  %v264 = vpop.f32.mrf.mxu0
  %v265 = vadd.f32 0.0, %v264
  %v266 = vpop.f32.mrf.mxu0
  %v267 = vpop.f32.mrf.mxu0
  %v268 = vadd.f32 0.0, %v267
  %v269 = vpop.f32.mrf.mxu0
  %270 = vmatprep.mubr.bf16.mxu0 0
  %271 = vmatmul.mubr.bf16.gmra.mxu0 %v139
  %v272 = vpop.f32.mrf.mxu0
  %v273 = vadd.f32 0.0, %v272
  %v274 = vpop.f32.mrf.mxu0
  %v275 = vpop.f32.mrf.mxu0
  %v276 = vadd.f32 0.0, %v275
  %v277 = vpop.f32.mrf.mxu0
  %278 = vmatprep.mubr.bf16.mxu0 0
  %279 = vmatmul.mubr.bf16.gmra.mxu0 %v140
  %v280 = vpop.f32.mrf.mxu0
  %v281 = vadd.f32 0.0, %v280
  %v282 = vpop.f32.mrf.mxu0
  %v283 = vpop.f32.mrf.mxu0
  %v284 = vadd.f32 0.0, %v283
  %v285 = vpop.f32.mrf.mxu0
  %286 = vmatprep.mubr.bf16.mxu0 0
  %287 = vmatmul.mubr.bf16.gmra.mxu0 %v141
  %v288 = vpop.f32.mrf.mxu0
  %v289 = vadd.f32 0.0, %v288
  %v290 = vpop.f32.mrf.mxu0
  %v291 = vpop.f32.mrf.mxu0
  %v292 = vadd.f32 0.0, %v291
  %v293 = vpop.f32.mrf.mxu0
  %294 = vdwg.mxu0
  %v295 = vld [vmem:[%s2] sm:$0xff]
  %v296 = vld [vmem:[%s2 + $0x8] sm:$0xff]
  %v297 = vld [vmem:[%s2 + $0x10] sm:$0xff]
  %v298 = vld [vmem:[%s2 + $0x18] sm:$0xff]
  %v299 = vld [vmem:[%s2 + $0x20] sm:$0xff]
  %v300 = vld [vmem:[%s2 + $0x28] sm:$0xff]
  %v301 = vld [vmem:[%s2 + $0x30] sm:$0xff]
  %v302 = vld [vmem:[%s2 + $0x38] sm:$0xff]
  %v303 = vld [vmem:[%s2 + $0x40] sm:$0xff]
  %v304 = vld [vmem:[%s2 + $0x48] sm:$0xff]
  %v305 = vld [vmem:[%s2 + $0x50] sm:$0xff]
  %v306 = vld [vmem:[%s2 + $0x58] sm:$0xff]
  %v307 = vld [vmem:[%s2 + $0x60] sm:$0xff]
  %v308 = vld [vmem:[%s2 + $0x68] sm:$0xff]
  %v309 = vld [vmem:[%s2 + $0x70] sm:$0xff]
  %v310 = vld [vmem:[%s2 + $0x78] sm:$0xff]
  %v311 = vld [vmem:[%s3] sm:$0x1]
  %312 = vset.pattern.permute.xlu0 0
  %313 = vperm.xlu0 %312, %v295
  %v314 = vpop.permute.xlu0 %313
  %315 = vset.pattern.permute.xlu0 0
  %316 = vperm.xlu0 %315, %v296
  %v317 = vpop.permute.xlu0 %316
  %318 = vset.pattern.permute.xlu0 0
  %319 = vperm.xlu0 %318, %v297
  %v320 = vpop.permute.xlu0 %319
  %321 = vset.pattern.permute.xlu0 0
  %322 = vperm.xlu0 %321, %v298
  %v323 = vpop.permute.xlu0 %322
  %324 = vset.pattern.permute.xlu0 0
  %325 = vperm.xlu0 %324, %v299
  %v326 = vpop.permute.xlu0 %325
  %327 = vset.pattern.permute.xlu0 0
  %328 = vperm.xlu0 %327, %v300
  %v329 = vpop.permute.xlu0 %328
  %330 = vset.pattern.permute.xlu0 0
  %331 = vperm.xlu0 %330, %v301
  %v332 = vpop.permute.xlu0 %331
  %333 = vset.pattern.permute.xlu0 0
  %334 = vperm.xlu0 %333, %v302
  %v335 = vpop.permute.xlu0 %334
  %336 = vset.pattern.permute.xlu0 0
  %337 = vperm.xlu0 %336, %v303
  %v338 = vpop.permute.xlu0 %337
  %339 = vset.pattern.permute.xlu0 0
  %340 = vperm.xlu0 %339, %v304
  %v341 = vpop.permute.xlu0 %340
  %342 = vset.pattern.permute.xlu0 0
  %343 = vperm.xlu0 %342, %v305
  %v344 = vpop.permute.xlu0 %343
  %345 = vset.pattern.permute.xlu0 0
  %346 = vperm.xlu0 %345, %v306
  %v347 = vpop.permute.xlu0 %346
  %348 = vset.pattern.permute.xlu0 0
  %349 = vperm.xlu0 %348, %v307
  %v350 = vpop.permute.xlu0 %349
  %351 = vset.pattern.permute.xlu0 0
  %352 = vperm.xlu0 %351, %v308
  %v353 = vpop.permute.xlu0 %352
  %354 = vset.pattern.permute.xlu0 0
  %355 = vperm.xlu0 %354, %v309
  %v356 = vpop.permute.xlu0 %355
  %357 = vset.pattern.permute.xlu0 0
  %358 = vperm.xlu0 %357, %v310
  %v359 = vpop.permute.xlu0 %358
  %v360 = vlaneseq
  %v361 = vshrl.u32 %v360, 7
  %v362 = vsub.s32 0, %v361
  %v363 = vrot.slane %v311, %v362
  %vm364 = vcmp.eq.s32.totalorder %v314, %v363
  %vm365 = vcmp.eq.s32.totalorder %v317, %v363
  %vm366 = vcmp.eq.s32.totalorder %v320, %v363
  %vm367 = vcmp.eq.s32.totalorder %v323, %v363
  %vm368 = vcmp.eq.s32.totalorder %v326, %v363
  %vm369 = vcmp.eq.s32.totalorder %v329, %v363
  %vm370 = vcmp.eq.s32.totalorder %v332, %v363
  %vm371 = vcmp.eq.s32.totalorder %v335, %v363
  %vm372 = vcmp.eq.s32.totalorder %v338, %v363
  %vm373 = vcmp.eq.s32.totalorder %v341, %v363
  %vm374 = vcmp.eq.s32.totalorder %v344, %v363
  %vm375 = vcmp.eq.s32.totalorder %v347, %v363
  %vm376 = vcmp.eq.s32.totalorder %v350, %v363
  %vm377 = vcmp.eq.s32.totalorder %v353, %v363
  %vm378 = vcmp.eq.s32.totalorder %v356, %v363
  %vm379 = vcmp.eq.s32.totalorder %v359, %v363
  %s380 = smul.u32 0, 128
  %s381 = smul.u32 0, 128
  %s382 = sadd.s32 %s381, 128
  %p383 = scmp.lt.s32.totalorder %s380, %s382
  %s384 = sadd.s32 %s380, 128
  %p385 = scmp.lt.s32.totalorder %s381, %s384
  %p386 = pnand %p383, %p385
  %p387 = pneg %p386
  %p388 = por %p387, %p18
  // Predicated region
  $region22: #{tpu_custom_call.1} parent=0 // pred_check
    %p389 = pneg %p388
  $region23: #{tpu_custom_call.1} parent=0 // pred_check_branch
    %391 = sbr.rel (%p389) target = $region25
  $region24: #{tpu_custom_call.1} parent=0 // pred_region
    %v392 = vlaneseq
    %v393 = vshrl.u32 %v392, 7
    %v394 = vadd.s32 %v393, 8
    %v395 = vadd.s32 %v393, 16
    %v396 = vadd.s32 %v393, 24
    %v397 = vadd.s32 %v393, 32
    %v398 = vadd.s32 %v393, 40
    %v399 = vadd.s32 %v393, 48
    %v400 = vadd.s32 %v393, 56
    %v401 = vadd.s32 %v393, 64
    %v402 = vadd.s32 %v393, 72
    %v403 = vadd.s32 %v393, 80
    %v404 = vadd.s32 %v393, 88
    %v405 = vadd.s32 %v393, 96
    %v406 = vadd.s32 %v393, 104
    %v407 = vadd.s32 %v393, 112
    %v408 = vadd.s32 %v393, 120
    %v409 = vstv %s380
    %v410 = vadd.s32 %v409, %v393
    %v411 = vadd.s32 %v409, %v394
    %v412 = vadd.s32 %v409, %v395
    %v413 = vadd.s32 %v409, %v396
    %v414 = vadd.s32 %v409, %v397
    %v415 = vadd.s32 %v409, %v398
    %v416 = vadd.s32 %v409, %v399
    %v417 = vadd.s32 %v409, %v400
    %v418 = vadd.s32 %v409, %v401
    %v419 = vadd.s32 %v409, %v402
    %v420 = vadd.s32 %v409, %v403
    %v421 = vadd.s32 %v409, %v404
    %v422 = vadd.s32 %v409, %v405
    %v423 = vadd.s32 %v409, %v406
    %v424 = vadd.s32 %v409, %v407
    %v425 = vadd.s32 %v409, %v408
    %v426 = vlaneseq
    %v427 = vand.u32 %v426, 127
    %v428 = vstv %s381
    %v429 = vadd.s32 %v428, %v427
    %vm430 = vcmp.ne.s32.totalorder %v410, %v429
    %vm431 = vcmp.ne.s32.totalorder %v411, %v429
    %vm432 = vcmp.ne.s32.totalorder %v412, %v429
    %vm433 = vcmp.ne.s32.totalorder %v413, %v429
    %vm434 = vcmp.ne.s32.totalorder %v414, %v429
    %vm435 = vcmp.ne.s32.totalorder %v415, %v429
    %vm436 = vcmp.ne.s32.totalorder %v416, %v429
    %vm437 = vcmp.ne.s32.totalorder %v417, %v429
    %vm438 = vcmp.ne.s32.totalorder %v418, %v429
    %vm439 = vcmp.ne.s32.totalorder %v419, %v429
    %vm440 = vcmp.ne.s32.totalorder %v420, %v429
    %vm441 = vcmp.ne.s32.totalorder %v421, %v429
    %vm442 = vcmp.ne.s32.totalorder %v422, %v429
    %vm443 = vcmp.ne.s32.totalorder %v423, %v429
    %vm444 = vcmp.ne.s32.totalorder %v424, %v429
    %vm445 = vcmp.ne.s32.totalorder %v425, %v429
    %vm446 = vcmp.lt.s32.totalorder %v429, 8
    %vm447 = vmand %vm430, %vm446
    %vm448 = vmand %vm431, %vm446
    %vm449 = vmand %vm432, %vm446
    %vm450 = vmand %vm433, %vm446
    %vm451 = vmand %vm434, %vm446
    %vm452 = vmand %vm435, %vm446
    %vm453 = vmand %vm436, %vm446
    %vm454 = vmand %vm437, %vm446
    %vm455 = vmand %vm438, %vm446
    %vm456 = vmand %vm439, %vm446
    %vm457 = vmand %vm440, %vm446
    %vm458 = vmand %vm441, %vm446
    %vm459 = vmand %vm442, %vm446
    %vm460 = vmand %vm443, %vm446
    %vm461 = vmand %vm444, %vm446
    %vm462 = vmand %vm445, %vm446
    %vm463 = vmand %vm364, %vm447
    %vm464 = vmand %vm365, %vm448
    %vm465 = vmand %vm366, %vm449
    %vm466 = vmand %vm367, %vm450
    %vm467 = vmand %vm368, %vm451
    %vm468 = vmand %vm369, %vm452
    %vm469 = vmand %vm370, %vm453
    %vm470 = vmand %vm371, %vm454
    %vm471 = vmand %vm372, %vm455
    %vm472 = vmand %vm373, %vm456
    %vm473 = vmand %vm374, %vm457
    %vm474 = vmand %vm375, %vm458
    %vm475 = vmand %vm376, %vm459
    %vm476 = vmand %vm377, %vm460
    %vm477 = vmand %vm378, %vm461
    %vm478 = vmand %vm379, %vm462
    %v479 = vsel %vm463, 1, 0
    %v480 = vsel %vm464, 1, 0
    %v481 = vsel %vm465, 1, 0
    %v482 = vsel %vm466, 1, 0
    %v483 = vsel %vm467, 1, 0
    %v484 = vsel %vm468, 1, 0
    %v485 = vsel %vm469, 1, 0
    %v486 = vsel %vm470, 1, 0
    %v487 = vsel %vm471, 1, 0
    %v488 = vsel %vm472, 1, 0
    %v489 = vsel %vm473, 1, 0
    %v490 = vsel %vm474, 1, 0
    %v491 = vsel %vm475, 1, 0
    %v492 = vsel %vm476, 1, 0
    %v493 = vsel %vm477, 1, 0
    %v494 = vsel %vm478, 1, 0
    %v495 = vcvt.s32.f32 %v479
    %v496 = vcvt.s32.f32 %v480
    %v497 = vcvt.s32.f32 %v481
    %v498 = vcvt.s32.f32 %v482
    %v499 = vcvt.s32.f32 %v483
    %v500 = vcvt.s32.f32 %v484
    %v501 = vcvt.s32.f32 %v485
    %v502 = vcvt.s32.f32 %v486
    %v503 = vcvt.s32.f32 %v487
    %v504 = vcvt.s32.f32 %v488
    %v505 = vcvt.s32.f32 %v489
    %v506 = vcvt.s32.f32 %v490
    %v507 = vcvt.s32.f32 %v491
    %v508 = vcvt.s32.f32 %v492
    %v509 = vcvt.s32.f32 %v493
    %v510 = vcvt.s32.f32 %v494
    %v511 = vsel %vm447, %v233, -1e+30
    %v512 = vsel %vm448, %v236, -1e+30
    %v513 = vsel %vm449, %v241, -1e+30
    %v514 = vsel %vm450, %v244, -1e+30
    %v515 = vsel %vm451, %v249, -1e+30
    %v516 = vsel %vm452, %v252, -1e+30
    %v517 = vsel %vm453, %v257, -1e+30
    %v518 = vsel %vm454, %v260, -1e+30
    %v519 = vsel %vm455, %v265, -1e+30
    %v520 = vsel %vm456, %v268, -1e+30
    %v521 = vsel %vm457, %v273, -1e+30
    %v522 = vsel %vm458, %v276, -1e+30
    %v523 = vsel %vm459, %v281, -1e+30
    %v524 = vsel %vm460, %v284, -1e+30
    %v525 = vsel %vm461, %v289, -1e+30
    %v526 = vsel %vm462, %v292, -1e+30
    %v527 = vld [vmem:[#allocation2] sm:$0xff]
    %v528 = vld [vmem:[#allocation2 + $0x8] sm:$0xff]
    %v529 = vld [vmem:[#allocation2 + $0x10] sm:$0xff]
    %v530 = vld [vmem:[#allocation2 + $0x18] sm:$0xff]
    %v531 = vld [vmem:[#allocation2 + $0x20] sm:$0xff]
    %v532 = vld [vmem:[#allocation2 + $0x28] sm:$0xff]
    %v533 = vld [vmem:[#allocation2 + $0x30] sm:$0xff]
    %v534 = vld [vmem:[#allocation2 + $0x38] sm:$0xff]
    %v535 = vld [vmem:[#allocation2 + $0x40] sm:$0xff]
    %v536 = vld [vmem:[#allocation2 + $0x48] sm:$0xff]
    %v537 = vld [vmem:[#allocation2 + $0x50] sm:$0xff]
    %v538 = vld [vmem:[#allocation2 + $0x58] sm:$0xff]
    %v539 = vld [vmem:[#allocation2 + $0x60] sm:$0xff]
    %v540 = vld [vmem:[#allocation2 + $0x68] sm:$0xff]
    %v541 = vld [vmem:[#allocation2 + $0x70] sm:$0xff]
    %v542 = vld [vmem:[#allocation2 + $0x78] sm:$0xff]
    %v543 = vsub.f32 %v511, 1.0
    %v544 = vsub.f32 %v512, 1.0
    %v545 = vsub.f32 %v513, 1.0
    %v546 = vsub.f32 %v514, 1.0
    %v547 = vsub.f32 %v515, 1.0
    %v548 = vsub.f32 %v516, 1.0
    %v549 = vsub.f32 %v517, 1.0
    %v550 = vsub.f32 %v518, 1.0
    %v551 = vsub.f32 %v519, 1.0
    %v552 = vsub.f32 %v520, 1.0
    %v553 = vsub.f32 %v521, 1.0
    %v554 = vsub.f32 %v522, 1.0
    %v555 = vsub.f32 %v523, 1.0
    %v556 = vsub.f32 %v524, 1.0
    %v557 = vsub.f32 %v525, 1.0
    %v558 = vsub.f32 %v526, 1.0
    %v559 = vmul.f32 %v543, 1.442695
    %v560 = vpow.pop %v559
    %v561 = vmul.f32 %v544, 1.442695
    %v562 = vpow.pop %v561
    %v563 = vmul.f32 %v545, 1.442695
    %v564 = vpow.pop %v563
    %v565 = vmul.f32 %v546, 1.442695
    %v566 = vpow.pop %v565
    %v567 = vmul.f32 %v547, 1.442695
    %v568 = vpow.pop %v567
    %v569 = vmul.f32 %v548, 1.442695
    %v570 = vpow.pop %v569
    %v571 = vmul.f32 %v549, 1.442695
    %v572 = vpow.pop %v571
    %v573 = vmul.f32 %v550, 1.442695
    %v574 = vpow.pop %v573
    %v575 = vmul.f32 %v551, 1.442695
    %v576 = vpow.pop %v575
    %v577 = vmul.f32 %v552, 1.442695
    %v578 = vpow.pop %v577
    %v579 = vmul.f32 %v553, 1.442695
    %v580 = vpow.pop %v579
    %v581 = vmul.f32 %v554, 1.442695
    %v582 = vpow.pop %v581
    %v583 = vmul.f32 %v555, 1.442695
    %v584 = vpow.pop %v583
    %v585 = vmul.f32 %v556, 1.442695
    %v586 = vpow.pop %v585
    %v587 = vmul.f32 %v557, 1.442695
    %v588 = vpow.pop %v587
    %v589 = vmul.f32 %v558, 1.442695
    %v590 = vpow.pop %v589
    %v591 = vadd.f32 %v527, %v560
    %v592 = vadd.f32 %v528, %v562
    %v593 = vadd.f32 %v529, %v564
    %v594 = vadd.f32 %v530, %v566
    %v595 = vadd.f32 %v531, %v568
    %v596 = vadd.f32 %v532, %v570
    %v597 = vadd.f32 %v533, %v572
    %v598 = vadd.f32 %v534, %v574
    %v599 = vadd.f32 %v535, %v576
    %v600 = vadd.f32 %v536, %v578
    %v601 = vadd.f32 %v537, %v580
    %v602 = vadd.f32 %v538, %v582
    %v603 = vadd.f32 %v539, %v584
    %v604 = vadd.f32 %v540, %v586
    %v605 = vadd.f32 %v541, %v588
    %v606 = vadd.f32 %v542, %v590
    %607 = vst [vmem:[#allocation2] sm:$0xff] %v591
    %608 = vst [vmem:[#allocation2 + $0x8] sm:$0xff] %v592
    %609 = vst [vmem:[#allocation2 + $0x10] sm:$0xff] %v593
    %610 = vst [vmem:[#allocation2 + $0x18] sm:$0xff] %v594
    %611 = vst [vmem:[#allocation2 + $0x20] sm:$0xff] %v595
    %612 = vst [vmem:[#allocation2 + $0x28] sm:$0xff] %v596
    %613 = vst [vmem:[#allocation2 + $0x30] sm:$0xff] %v597
    %614 = vst [vmem:[#allocation2 + $0x38] sm:$0xff] %v598
    %615 = vst [vmem:[#allocation2 + $0x40] sm:$0xff] %v599
    %616 = vst [vmem:[#allocation2 + $0x48] sm:$0xff] %v600
    %617 = vst [vmem:[#allocation2 + $0x50] sm:$0xff] %v601
    %618 = vst [vmem:[#allocation2 + $0x58] sm:$0xff] %v602
    %619 = vst [vmem:[#allocation2 + $0x60] sm:$0xff] %v603
    %620 = vst [vmem:[#allocation2 + $0x68] sm:$0xff] %v604
    %621 = vst [vmem:[#allocation2 + $0x70] sm:$0xff] %v605
    %622 = vst [vmem:[#allocation2 + $0x78] sm:$0xff] %v606
    %v623 = vld [vmem:[#allocation3] sm:$0xff]
    %v624 = vld [vmem:[#allocation3 + $0x8] sm:$0xff]
    %v625 = vld [vmem:[#allocation3 + $0x10] sm:$0xff]
    %v626 = vld [vmem:[#allocation3 + $0x18] sm:$0xff]
    %v627 = vld [vmem:[#allocation3 + $0x20] sm:$0xff]
    %v628 = vld [vmem:[#allocation3 + $0x28] sm:$0xff]
    %v629 = vld [vmem:[#allocation3 + $0x30] sm:$0xff]
    %v630 = vld [vmem:[#allocation3 + $0x38] sm:$0xff]
    %v631 = vld [vmem:[#allocation3 + $0x40] sm:$0xff]
    %v632 = vld [vmem:[#allocation3 + $0x48] sm:$0xff]
    %v633 = vld [vmem:[#allocation3 + $0x50] sm:$0xff]
    %v634 = vld [vmem:[#allocation3 + $0x58] sm:$0xff]
    %v635 = vld [vmem:[#allocation3 + $0x60] sm:$0xff]
    %v636 = vld [vmem:[#allocation3 + $0x68] sm:$0xff]
    %v637 = vld [vmem:[#allocation3 + $0x70] sm:$0xff]
    %v638 = vld [vmem:[#allocation3 + $0x78] sm:$0xff]
    %v639 = vmul.f32 %v233, %v495
    %v640 = vmul.f32 %v236, %v496
    %v641 = vmul.f32 %v241, %v497
    %v642 = vmul.f32 %v244, %v498
    %v643 = vmul.f32 %v249, %v499
    %v644 = vmul.f32 %v252, %v500
    %v645 = vmul.f32 %v257, %v501
    %v646 = vmul.f32 %v260, %v502
    %v647 = vmul.f32 %v265, %v503
    %v648 = vmul.f32 %v268, %v504
    %v649 = vmul.f32 %v273, %v505
    %v650 = vmul.f32 %v276, %v506
    %v651 = vmul.f32 %v281, %v507
    %v652 = vmul.f32 %v284, %v508
    %v653 = vmul.f32 %v289, %v509
    %v654 = vmul.f32 %v292, %v510
    %v655 = vadd.f32 %v623, %v639
    %v656 = vadd.f32 %v624, %v640
    %v657 = vadd.f32 %v625, %v641
    %v658 = vadd.f32 %v626, %v642
    %v659 = vadd.f32 %v627, %v643
    %v660 = vadd.f32 %v628, %v644
    %v661 = vadd.f32 %v629, %v645
    %v662 = vadd.f32 %v630, %v646
    %v663 = vadd.f32 %v631, %v647
    %v664 = vadd.f32 %v632, %v648
    %v665 = vadd.f32 %v633, %v649
    %v666 = vadd.f32 %v634, %v650
    %v667 = vadd.f32 %v635, %v651
    %v668 = vadd.f32 %v636, %v652
    %v669 = vadd.f32 %v637, %v653
    %v670 = vadd.f32 %v638, %v654
    %671 = vst [vmem:[#allocation3] sm:$0xff] %v655
    %672 = vst [vmem:[#allocation3 + $0x8] sm:$0xff] %v656
    %673 = vst [vmem:[#allocation3 + $0x10] sm:$0xff] %v657
    %674 = vst [vmem:[#allocation3 + $0x18] sm:$0xff] %v658
    %675 = vst [vmem:[#allocation3 + $0x20] sm:$0xff] %v659
    %676 = vst [vmem:[#allocation3 + $0x28] sm:$0xff] %v660
    %677 = vst [vmem:[#allocation3 + $0x30] sm:$0xff] %v661
    %678 = vst [vmem:[#allocation3 + $0x38] sm:$0xff] %v662
    %679 = vst [vmem:[#allocation3 + $0x40] sm:$0xff] %v663
    %680 = vst [vmem:[#allocation3 + $0x48] sm:$0xff] %v664
    %681 = vst [vmem:[#allocation3 + $0x50] sm:$0xff] %v665
    %682 = vst [vmem:[#allocation3 + $0x58] sm:$0xff] %v666
    %683 = vst [vmem:[#allocation3 + $0x60] sm:$0xff] %v667
    %684 = vst [vmem:[#allocation3 + $0x68] sm:$0xff] %v668
    %685 = vst [vmem:[#allocation3 + $0x70] sm:$0xff] %v669
    %686 = vst [vmem:[#allocation3 + $0x78] sm:$0xff] %v670
    %v687 = vld [vmem:[#allocation4] sm:$0xff]
    %v688 = vld [vmem:[#allocation4 + $0x8] sm:$0xff]
    %v689 = vld [vmem:[#allocation4 + $0x10] sm:$0xff]
    %v690 = vld [vmem:[#allocation4 + $0x18] sm:$0xff]
    %v691 = vld [vmem:[#allocation4 + $0x20] sm:$0xff]
    %v692 = vld [vmem:[#allocation4 + $0x28] sm:$0xff]
    %v693 = vld [vmem:[#allocation4 + $0x30] sm:$0xff]
    %v694 = vld [vmem:[#allocation4 + $0x38] sm:$0xff]
    %v695 = vld [vmem:[#allocation4 + $0x40] sm:$0xff]
    %v696 = vld [vmem:[#allocation4 + $0x48] sm:$0xff]
    %v697 = vld [vmem:[#allocation4 + $0x50] sm:$0xff]
    %v698 = vld [vmem:[#allocation4 + $0x58] sm:$0xff]
    %v699 = vld [vmem:[#allocation4 + $0x60] sm:$0xff]
    %v700 = vld [vmem:[#allocation4 + $0x68] sm:$0xff]
    %v701 = vld [vmem:[#allocation4 + $0x70] sm:$0xff]
    %v702 = vld [vmem:[#allocation4 + $0x78] sm:$0xff]
    %v703 = vadd.f32 %v687, %v495
    %v704 = vadd.f32 %v688, %v496
    %v705 = vadd.f32 %v689, %v497
    %v706 = vadd.f32 %v690, %v498
    %v707 = vadd.f32 %v691, %v499
    %v708 = vadd.f32 %v692, %v500
    %v709 = vadd.f32 %v693, %v501
    %v710 = vadd.f32 %v694, %v502
    %v711 = vadd.f32 %v695, %v503
    %v712 = vadd.f32 %v696, %v504
    %v713 = vadd.f32 %v697, %v505
    %v714 = vadd.f32 %v698, %v506
    %v715 = vadd.f32 %v699, %v507
    %v716 = vadd.f32 %v700, %v508
    %v717 = vadd.f32 %v701, %v509
    %v718 = vadd.f32 %v702, %v510
    %719 = vst [vmem:[#allocation4] sm:$0xff] %v703
    %720 = vst [vmem:[#allocation4 + $0x8] sm:$0xff] %v704
    %721 = vst [vmem:[#allocation4 + $0x10] sm:$0xff] %v705
    %722 = vst [vmem:[#allocation4 + $0x18] sm:$0xff] %v706
    %723 = vst [vmem:[#allocation4 + $0x20] sm:$0xff] %v707
    %724 = vst [vmem:[#allocation4 + $0x28] sm:$0xff] %v708
    %725 = vst [vmem:[#allocation4 + $0x30] sm:$0xff] %v709
    %726 = vst [vmem:[#allocation4 + $0x38] sm:$0xff] %v710
    %727 = vst [vmem:[#allocation4 + $0x40] sm:$0xff] %v711
    %728 = vst [vmem:[#allocation4 + $0x48] sm:$0xff] %v712
    %729 = vst [vmem:[#allocation4 + $0x50] sm:$0xff] %v713
    %730 = vst [vmem:[#allocation4 + $0x58] sm:$0xff] %v714
    %731 = vst [vmem:[#allocation4 + $0x60] sm:$0xff] %v715
    %732 = vst [vmem:[#allocation4 + $0x68] sm:$0xff] %v716
    %733 = vst [vmem:[#allocation4 + $0x70] sm:$0xff] %v717
    %734 = vst [vmem:[#allocation4 + $0x78] sm:$0xff] %v718
  $region25: #{tpu_custom_call.1} parent=0 // pred_fallthru
    _
  %p735 = pneg %p388
  // Predicated region
  $region26: #{tpu_custom_call.1} parent=0 // pred_check
    _
  $region27: #{tpu_custom_call.1} parent=0 // pred_check_branch
    %737 = sbr.rel (%p388) target = $region29
  $region28: #{tpu_custom_call.1} parent=0 // pred_region
    %v738 = vsel %vm364, 1, 0
    %v739 = vsel %vm365, 1, 0
    %v740 = vsel %vm366, 1, 0
    %v741 = vsel %vm367, 1, 0
    %v742 = vsel %vm368, 1, 0
    %v743 = vsel %vm369, 1, 0
    %v744 = vsel %vm370, 1, 0
    %v745 = vsel %vm371, 1, 0
    %v746 = vsel %vm372, 1, 0
    %v747 = vsel %vm373, 1, 0
    %v748 = vsel %vm374, 1, 0
    %v749 = vsel %vm375, 1, 0
    %v750 = vsel %vm376, 1, 0
    %v751 = vsel %vm377, 1, 0
    %v752 = vsel %vm378, 1, 0
    %v753 = vsel %vm379, 1, 0
    %v754 = vcvt.s32.f32 %v738
    %v755 = vcvt.s32.f32 %v739
    %v756 = vcvt.s32.f32 %v740
    %v757 = vcvt.s32.f32 %v741
    %v758 = vcvt.s32.f32 %v742
    %v759 = vcvt.s32.f32 %v743
    %v760 = vcvt.s32.f32 %v744
    %v761 = vcvt.s32.f32 %v745
    %v762 = vcvt.s32.f32 %v746
    %v763 = vcvt.s32.f32 %v747
    %v764 = vcvt.s32.f32 %v748
    %v765 = vcvt.s32.f32 %v749
    %v766 = vcvt.s32.f32 %v750
    %v767 = vcvt.s32.f32 %v751
    %v768 = vcvt.s32.f32 %v752
    %v769 = vcvt.s32.f32 %v753
    %v770 = vld [vmem:[#allocation2] sm:$0xff]
    %v771 = vld [vmem:[#allocation2 + $0x8] sm:$0xff]
    %v772 = vld [vmem:[#allocation2 + $0x10] sm:$0xff]
    %v773 = vld [vmem:[#allocation2 + $0x18] sm:$0xff]
    %v774 = vld [vmem:[#allocation2 + $0x20] sm:$0xff]
    %v775 = vld [vmem:[#allocation2 + $0x28] sm:$0xff]
    %v776 = vld [vmem:[#allocation2 + $0x30] sm:$0xff]
    %v777 = vld [vmem:[#allocation2 + $0x38] sm:$0xff]
    %v778 = vld [vmem:[#allocation2 + $0x40] sm:$0xff]
    %v779 = vld [vmem:[#allocation2 + $0x48] sm:$0xff]
    %v780 = vld [vmem:[#allocation2 + $0x50] sm:$0xff]
    %v781 = vld [vmem:[#allocation2 + $0x58] sm:$0xff]
    %v782 = vld [vmem:[#allocation2 + $0x60] sm:$0xff]
    %v783 = vld [vmem:[#allocation2 + $0x68] sm:$0xff]
    %v784 = vld [vmem:[#allocation2 + $0x70] sm:$0xff]
    %v785 = vld [vmem:[#allocation2 + $0x78] sm:$0xff]
    %v786 = vsub.f32 %v233, 1.0
    %v787 = vsub.f32 %v236, 1.0
    %v788 = vsub.f32 %v241, 1.0
    %v789 = vsub.f32 %v244, 1.0
    %v790 = vsub.f32 %v249, 1.0
    %v791 = vsub.f32 %v252, 1.0
    %v792 = vsub.f32 %v257, 1.0
    %v793 = vsub.f32 %v260, 1.0
    %v794 = vsub.f32 %v265, 1.0
    %v795 = vsub.f32 %v268, 1.0
    %v796 = vsub.f32 %v273, 1.0
    %v797 = vsub.f32 %v276, 1.0
    %v798 = vsub.f32 %v281, 1.0
    %v799 = vsub.f32 %v284, 1.0
    %v800 = vsub.f32 %v289, 1.0
    %v801 = vsub.f32 %v292, 1.0
    %v802 = vmul.f32 %v786, 1.442695
    %v803 = vpow.pop %v802
    %v804 = vmul.f32 %v787, 1.442695
    %v805 = vpow.pop %v804
    %v806 = vmul.f32 %v788, 1.442695
    %v807 = vpow.pop %v806
    %v808 = vmul.f32 %v789, 1.442695
    %v809 = vpow.pop %v808
    %v810 = vmul.f32 %v790, 1.442695
    %v811 = vpow.pop %v810
    %v812 = vmul.f32 %v791, 1.442695
    %v813 = vpow.pop %v812
    %v814 = vmul.f32 %v792, 1.442695
    %v815 = vpow.pop %v814
    %v816 = vmul.f32 %v793, 1.442695
    %v817 = vpow.pop %v816
    %v818 = vmul.f32 %v794, 1.442695
    %v819 = vpow.pop %v818
    %v820 = vmul.f32 %v795, 1.442695
    %v821 = vpow.pop %v820
    %v822 = vmul.f32 %v796, 1.442695
    %v823 = vpow.pop %v822
    %v824 = vmul.f32 %v797, 1.442695
    %v825 = vpow.pop %v824
    %v826 = vmul.f32 %v798, 1.442695
    %v827 = vpow.pop %v826
    %v828 = vmul.f32 %v799, 1.442695
    %v829 = vpow.pop %v828
    %v830 = vmul.f32 %v800, 1.442695
    %v831 = vpow.pop %v830
    %v832 = vmul.f32 %v801, 1.442695
    %v833 = vpow.pop %v832
    %v834 = vadd.f32 %v770, %v803
    %v835 = vadd.f32 %v771, %v805
    %v836 = vadd.f32 %v772, %v807
    %v837 = vadd.f32 %v773, %v809
    %v838 = vadd.f32 %v774, %v811
    %v839 = vadd.f32 %v775, %v813
    %v840 = vadd.f32 %v776, %v815
    %v841 = vadd.f32 %v777, %v817
    %v842 = vadd.f32 %v778, %v819
    %v843 = vadd.f32 %v779, %v821
    %v844 = vadd.f32 %v780, %v823
    %v845 = vadd.f32 %v781, %v825
    %v846 = vadd.f32 %v782, %v827
    %v847 = vadd.f32 %v783, %v829
    %v848 = vadd.f32 %v784, %v831
    %v849 = vadd.f32 %v785, %v833
    %850 = vst [vmem:[#allocation2] sm:$0xff] %v834
    %851 = vst [vmem:[#allocation2 + $0x8] sm:$0xff] %v835
    %852 = vst [vmem:[#allocation2 + $0x10] sm:$0xff] %v836
    %853 = vst [vmem:[#allocation2 + $0x18] sm:$0xff] %v837
    %854 = vst [vmem:[#allocation2 + $0x20] sm:$0xff] %v838
    %855 = vst [vmem:[#allocation2 + $0x28] sm:$0xff] %v839
    %856 = vst [vmem:[#allocation2 + $0x30] sm:$0xff] %v840
    %857 = vst [vmem:[#allocation2 + $0x38] sm:$0xff] %v841
    %858 = vst [vmem:[#allocation2 + $0x40] sm:$0xff] %v842
    %859 = vst [vmem:[#allocation2 + $0x48] sm:$0xff] %v843
    %860 = vst [vmem:[#allocation2 + $0x50] sm:$0xff] %v844
    %861 = vst [vmem:[#allocation2 + $0x58] sm:$0xff] %v845
    %862 = vst [vmem:[#allocation2 + $0x60] sm:$0xff] %v846
    %863 = vst [vmem:[#allocation2 + $0x68] sm:$0xff] %v847
    %864 = vst [vmem:[#allocation2 + $0x70] sm:$0xff] %v848
    %865 = vst [vmem:[#allocation2 + $0x78] sm:$0xff] %v849
    %v866 = vld [vmem:[#allocation3] sm:$0xff]
    %v867 = vld [vmem:[#allocation3 + $0x8] sm:$0xff]
    %v868 = vld [vmem:[#allocation3 + $0x10] sm:$0xff]
    %v869 = vld [vmem:[#allocation3 + $0x18] sm:$0xff]
    %v870 = vld [vmem:[#allocation3 + $0x20] sm:$0xff]
    %v871 = vld [vmem:[#allocation3 + $0x28] sm:$0xff]
    %v872 = vld [vmem:[#allocation3 + $0x30] sm:$0xff]
    %v873 = vld [vmem:[#allocation3 + $0x38] sm:$0xff]
    %v874 = vld [vmem:[#allocation3 + $0x40] sm:$0xff]
    %v875 = vld [vmem:[#allocation3 + $0x48] sm:$0xff]
    %v876 = vld [vmem:[#allocation3 + $0x50] sm:$0xff]
    %v877 = vld [vmem:[#allocation3 + $0x58] sm:$0xff]
    %v878 = vld [vmem:[#allocation3 + $0x60] sm:$0xff]
    %v879 = vld [vmem:[#allocation3 + $0x68] sm:$0xff]
    %v880 = vld [vmem:[#allocation3 + $0x70] sm:$0xff]
    %v881 = vld [vmem:[#allocation3 + $0x78] sm:$0xff]
    %v882 = vmul.f32 %v233, %v754
    %v883 = vmul.f32 %v236, %v755
    %v884 = vmul.f32 %v241, %v756
    %v885 = vmul.f32 %v244, %v757
    %v886 = vmul.f32 %v249, %v758
    %v887 = vmul.f32 %v252, %v759
    %v888 = vmul.f32 %v257, %v760
    %v889 = vmul.f32 %v260, %v761
    %v890 = vmul.f32 %v265, %v762
    %v891 = vmul.f32 %v268, %v763
    %v892 = vmul.f32 %v273, %v764
    %v893 = vmul.f32 %v276, %v765
    %v894 = vmul.f32 %v281, %v766
    %v895 = vmul.f32 %v284, %v767
    %v896 = vmul.f32 %v289, %v768
    %v897 = vmul.f32 %v292, %v769
    %v898 = vadd.f32 %v866, %v882
    %v899 = vadd.f32 %v867, %v883
    %v900 = vadd.f32 %v868, %v884
    %v901 = vadd.f32 %v869, %v885
    %v902 = vadd.f32 %v870, %v886
    %v903 = vadd.f32 %v871, %v887
    %v904 = vadd.f32 %v872, %v888
    %v905 = vadd.f32 %v873, %v889
    %v906 = vadd.f32 %v874, %v890
    %v907 = vadd.f32 %v875, %v891
    %v908 = vadd.f32 %v876, %v892
    %v909 = vadd.f32 %v877, %v893
    %v910 = vadd.f32 %v878, %v894
    %v911 = vadd.f32 %v879, %v895
    %v912 = vadd.f32 %v880, %v896
    %v913 = vadd.f32 %v881, %v897
    %914 = vst [vmem:[#allocation3] sm:$0xff] %v898
    %915 = vst [vmem:[#allocation3 + $0x8] sm:$0xff] %v899
    %916 = vst [vmem:[#allocation3 + $0x10] sm:$0xff] %v900
    %917 = vst [vmem:[#allocation3 + $0x18] sm:$0xff] %v901
    %918 = vst [vmem:[#allocation3 + $0x20] sm:$0xff] %v902
    %919 = vst [vmem:[#allocation3 + $0x28] sm:$0xff] %v903
    %920 = vst [vmem:[#allocation3 + $0x30] sm:$0xff] %v904
    %921 = vst [vmem:[#allocation3 + $0x38] sm:$0xff] %v905
    %922 = vst [vmem:[#allocation3 + $0x40] sm:$0xff] %v906
    %923 = vst [vmem:[#allocation3 + $0x48] sm:$0xff] %v907
    %924 = vst [vmem:[#allocation3 + $0x50] sm:$0xff] %v908
    %925 = vst [vmem:[#allocation3 + $0x58] sm:$0xff] %v909
    %926 = vst [vmem:[#allocation3 + $0x60] sm:$0xff] %v910
    %927 = vst [vmem:[#allocation3 + $0x68] sm:$0xff] %v911
    %928 = vst [vmem:[#allocation3 + $0x70] sm:$0xff] %v912
    %929 = vst [vmem:[#allocation3 + $0x78] sm:$0xff] %v913
    %v930 = vld [vmem:[#allocation4] sm:$0xff]
    %v931 = vld [vmem:[#allocation4 + $0x8] sm:$0xff]
    %v932 = vld [vmem:[#allocation4 + $0x10] sm:$0xff]
    %v933 = vld [vmem:[#allocation4 + $0x18] sm:$0xff]
    %v934 = vld [vmem:[#allocation4 + $0x20] sm:$0xff]
    %v935 = vld [vmem:[#allocation4 + $0x28] sm:$0xff]
    %v936 = vld [vmem:[#allocation4 + $0x30] sm:$0xff]
    %v937 = vld [vmem:[#allocation4 + $0x38] sm:$0xff]
    %v938 = vld [vmem:[#allocation4 + $0x40] sm:$0xff]
    %v939 = vld [vmem:[#allocation4 + $0x48] sm:$0xff]
    %v940 = vld [vmem:[#allocation4 + $0x50] sm:$0xff]
    %v941 = vld [vmem:[#allocation4 + $0x58] sm:$0xff]
    %v942 = vld [vmem:[#allocation4 + $0x60] sm:$0xff]
    %v943 = vld [vmem:[#allocation4 + $0x68] sm:$0xff]
    %v944 = vld [vmem:[#allocation4 + $0x70] sm:$0xff]
    %v945 = vld [vmem:[#allocation4 + $0x78] sm:$0xff]
    %v946 = vadd.f32 %v930, %v754
    %v947 = vadd.f32 %v931, %v755
    %v948 = vadd.f32 %v932, %v756
    %v949 = vadd.f32 %v933, %v757
    %v950 = vadd.f32 %v934, %v758
    %v951 = vadd.f32 %v935, %v759
    %v952 = vadd.f32 %v936, %v760
    %v953 = vadd.f32 %v937, %v761
    %v954 = vadd.f32 %v938, %v762
    %v955 = vadd.f32 %v939, %v763
    %v956 = vadd.f32 %v940, %v764
    %v957 = vadd.f32 %v941, %v765
    %v958 = vadd.f32 %v942, %v766
    %v959 = vadd.f32 %v943, %v767
    %v960 = vadd.f32 %v944, %v768
    %v961 = vadd.f32 %v945, %v769
    %962 = vst [vmem:[#allocation4] sm:$0xff] %v946
    %963 = vst [vmem:[#allocation4 + $0x8] sm:$0xff] %v947
    %964 = vst [vmem:[#allocation4 + $0x10] sm:$0xff] %v948
    %965 = vst [vmem:[#allocation4 + $0x18] sm:$0xff] %v949
    %966 = vst [vmem:[#allocation4 + $0x20] sm:$0xff] %v950
    %967 = vst [vmem:[#allocation4 + $0x28] sm:$0xff] %v951
    %968 = vst [vmem:[#allocation4 + $0x30] sm:$0xff] %v952
    %969 = vst [vmem:[#allocation4 + $0x38] sm:$0xff] %v953
    %970 = vst [vmem:[#allocation4 + $0x40] sm:$0xff] %v954
    %971 = vst [vmem:[#allocation4 + $0x48] sm:$0xff] %v955
    %972 = vst [vmem:[#allocation4 + $0x50] sm:$0xff] %v956
    %973 = vst [vmem:[#allocation4 + $0x58] sm:$0xff] %v957
    %974 = vst [vmem:[#allocation4 + $0x60] sm:$0xff] %v958
    %975 = vst [vmem:[#allocation4 + $0x68] sm:$0xff] %v959
    %976 = vst [vmem:[#allocation4 + $0x70] sm:$0xff] %v960
    %977 = vst [vmem:[#allocation4 + $0x78] sm:$0xff] %v961
  $region29: #{tpu_custom_call.1} parent=0 // pred_fallthru
    _
  // Predicated region
  $region30: #{tpu_custom_call.1} parent=0 // pred_check
    %p978 = pneg %p18
  $region31: #{tpu_custom_call.1} parent=0 // pred_check_branch
    %980 = sbr.rel (%p978) target = $region33
  $region32: #{tpu_custom_call.1} parent=0 // pred_region
    %v981 = vld [vmem:[#allocation2] sm:$0xff]
    %v982 = vld [vmem:[#allocation2 + $0x8] sm:$0xff]
    %v983 = vld [vmem:[#allocation2 + $0x10] sm:$0xff]
    %v984 = vld [vmem:[#allocation2 + $0x18] sm:$0xff]
    %v985 = vld [vmem:[#allocation2 + $0x20] sm:$0xff]
    %v986 = vld [vmem:[#allocation2 + $0x28] sm:$0xff]
    %v987 = vld [vmem:[#allocation2 + $0x30] sm:$0xff]
    %v988 = vld [vmem:[#allocation2 + $0x38] sm:$0xff]
    %v989 = vld [vmem:[#allocation2 + $0x40] sm:$0xff]
    %v990 = vld [vmem:[#allocation2 + $0x48] sm:$0xff]
    %v991 = vld [vmem:[#allocation2 + $0x50] sm:$0xff]
    %v992 = vld [vmem:[#allocation2 + $0x58] sm:$0xff]
    %v993 = vld [vmem:[#allocation2 + $0x60] sm:$0xff]
    %v994 = vld [vmem:[#allocation2 + $0x68] sm:$0xff]
    %v995 = vld [vmem:[#allocation2 + $0x70] sm:$0xff]
    %v996 = vld [vmem:[#allocation2 + $0x78] sm:$0xff]
    %997 = vadd.xlane.f32.xlu0 %v981
    %v998 = vpop.xlane.xlu0 %997
    %999 = vadd.xlane.f32.xlu0 %v982
    %v1000 = vpop.xlane.xlu0 %999
    %1001 = vadd.xlane.f32.xlu0 %v983
    %v1002 = vpop.xlane.xlu0 %1001
    %1003 = vadd.xlane.f32.xlu0 %v984
    %v1004 = vpop.xlane.xlu0 %1003
    %1005 = vadd.xlane.f32.xlu0 %v985
    %v1006 = vpop.xlane.xlu0 %1005
    %1007 = vadd.xlane.f32.xlu0 %v986
    %v1008 = vpop.xlane.xlu0 %1007
    %1009 = vadd.xlane.f32.xlu0 %v987
    %v1010 = vpop.xlane.xlu0 %1009
    %1011 = vadd.xlane.f32.xlu0 %v988
    %v1012 = vpop.xlane.xlu0 %1011
    %1013 = vadd.xlane.f32.xlu0 %v989
    %v1014 = vpop.xlane.xlu0 %1013
    %1015 = vadd.xlane.f32.xlu0 %v990
    %v1016 = vpop.xlane.xlu0 %1015
    %1017 = vadd.xlane.f32.xlu0 %v991
    %v1018 = vpop.xlane.xlu0 %1017
    %1019 = vadd.xlane.f32.xlu0 %v992
    %v1020 = vpop.xlane.xlu0 %1019
    %1021 = vadd.xlane.f32.xlu0 %v993
    %v1022 = vpop.xlane.xlu0 %1021
    %1023 = vadd.xlane.f32.xlu0 %v994
    %v1024 = vpop.xlane.xlu0 %1023
    %1025 = vadd.xlane.f32.xlu0 %v995
    %v1026 = vpop.xlane.xlu0 %1025
    %1027 = vadd.xlane.f32.xlu0 %v996
    %v1028 = vpop.xlane.xlu0 %1027
    %v1029 = vlog2.pop %v998
    %v1030 = vmul.f32 %v1029, 0.6931472
    %v1031 = vlog2.pop %v1000
    %v1032 = vmul.f32 %v1031, 0.6931472
    %v1033 = vlog2.pop %v1002
    %v1034 = vmul.f32 %v1033, 0.6931472
    %v1035 = vlog2.pop %v1004
    %v1036 = vmul.f32 %v1035, 0.6931472
    %v1037 = vlog2.pop %v1006
    %v1038 = vmul.f32 %v1037, 0.6931472
    %v1039 = vlog2.pop %v1008
    %v1040 = vmul.f32 %v1039, 0.6931472
    %v1041 = vlog2.pop %v1010
    %v1042 = vmul.f32 %v1041, 0.6931472
    %v1043 = vlog2.pop %v1012
    %v1044 = vmul.f32 %v1043, 0.6931472
    %v1045 = vlog2.pop %v1014
    %v1046 = vmul.f32 %v1045, 0.6931472
    %v1047 = vlog2.pop %v1016
    %v1048 = vmul.f32 %v1047, 0.6931472
    %v1049 = vlog2.pop %v1018
    %v1050 = vmul.f32 %v1049, 0.6931472
    %v1051 = vlog2.pop %v1020
    %v1052 = vmul.f32 %v1051, 0.6931472
    %v1053 = vlog2.pop %v1022
    %v1054 = vmul.f32 %v1053, 0.6931472
    %v1055 = vlog2.pop %v1024
    %v1056 = vmul.f32 %v1055, 0.6931472
    %v1057 = vlog2.pop %v1026
    %v1058 = vmul.f32 %v1057, 0.6931472
    %v1059 = vlog2.pop %v1028
    %v1060 = vmul.f32 %v1059, 0.6931472
    %v1061 = vadd.f32 %v1030, 1.0
    %v1062 = vadd.f32 %v1032, 1.0
    %v1063 = vadd.f32 %v1034, 1.0
    %v1064 = vadd.f32 %v1036, 1.0
    %v1065 = vadd.f32 %v1038, 1.0
    %v1066 = vadd.f32 %v1040, 1.0
    %v1067 = vadd.f32 %v1042, 1.0
    %v1068 = vadd.f32 %v1044, 1.0
    %v1069 = vadd.f32 %v1046, 1.0
    %v1070 = vadd.f32 %v1048, 1.0
    %v1071 = vadd.f32 %v1050, 1.0
    %v1072 = vadd.f32 %v1052, 1.0
    %v1073 = vadd.f32 %v1054, 1.0
    %v1074 = vadd.f32 %v1056, 1.0
    %v1075 = vadd.f32 %v1058, 1.0
    %v1076 = vadd.f32 %v1060, 1.0
    %v1077 = vld [vmem:[#allocation4] sm:$0xff]
    %v1078 = vld [vmem:[#allocation4 + $0x8] sm:$0xff]
    %v1079 = vld [vmem:[#allocation4 + $0x10] sm:$0xff]
    %v1080 = vld [vmem:[#allocation4 + $0x18] sm:$0xff]
    %v1081 = vld [vmem:[#allocation4 + $0x20] sm:$0xff]
    %v1082 = vld [vmem:[#allocation4 + $0x28] sm:$0xff]
    %v1083 = vld [vmem:[#allocation4 + $0x30] sm:$0xff]
    %v1084 = vld [vmem:[#allocation4 + $0x38] sm:$0xff]
    %v1085 = vld [vmem:[#allocation4 + $0x40] sm:$0xff]
    %v1086 = vld [vmem:[#allocation4 + $0x48] sm:$0xff]
    %v1087 = vld [vmem:[#allocation4 + $0x50] sm:$0xff]
    %v1088 = vld [vmem:[#allocation4 + $0x58] sm:$0xff]
    %v1089 = vld [vmem:[#allocation4 + $0x60] sm:$0xff]
    %v1090 = vld [vmem:[#allocation4 + $0x68] sm:$0xff]
    %v1091 = vld [vmem:[#allocation4 + $0x70] sm:$0xff]
    %v1092 = vld [vmem:[#allocation4 + $0x78] sm:$0xff]
    %1093 = vadd.xlane.f32.xlu0 %v1077
    %v1094 = vpop.xlane.xlu0 %1093
    %1095 = vadd.xlane.f32.xlu0 %v1078
    %v1096 = vpop.xlane.xlu0 %1095
    %1097 = vadd.xlane.f32.xlu0 %v1079
    %v1098 = vpop.xlane.xlu0 %1097
    %1099 = vadd.xlane.f32.xlu0 %v1080
    %v1100 = vpop.xlane.xlu0 %1099
    %1101 = vadd.xlane.f32.xlu0 %v1081
    %v1102 = vpop.xlane.xlu0 %1101
    %1103 = vadd.xlane.f32.xlu0 %v1082
    %v1104 = vpop.xlane.xlu0 %1103
    %1105 = vadd.xlane.f32.xlu0 %v1083
    %v1106 = vpop.xlane.xlu0 %1105
    %1107 = vadd.xlane.f32.xlu0 %v1084
    %v1108 = vpop.xlane.xlu0 %1107
    %1109 = vadd.xlane.f32.xlu0 %v1085
    %v1110 = vpop.xlane.xlu0 %1109
    %1111 = vadd.xlane.f32.xlu0 %v1086
    %v1112 = vpop.xlane.xlu0 %1111
    %1113 = vadd.xlane.f32.xlu0 %v1087
    %v1114 = vpop.xlane.xlu0 %1113
    %1115 = vadd.xlane.f32.xlu0 %v1088
    %v1116 = vpop.xlane.xlu0 %1115
    %1117 = vadd.xlane.f32.xlu0 %v1089
    %v1118 = vpop.xlane.xlu0 %1117
    %1119 = vadd.xlane.f32.xlu0 %v1090
    %v1120 = vpop.xlane.xlu0 %1119
    %1121 = vadd.xlane.f32.xlu0 %v1091
    %v1122 = vpop.xlane.xlu0 %1121
    %1123 = vadd.xlane.f32.xlu0 %v1092
    %v1124 = vpop.xlane.xlu0 %1123
    %v1125 = vld [vmem:[#allocation3] sm:$0xff]
    %v1126 = vld [vmem:[#allocation3 + $0x8] sm:$0xff]
    %v1127 = vld [vmem:[#allocation3 + $0x10] sm:$0xff]
    %v1128 = vld [vmem:[#allocation3 + $0x18] sm:$0xff]
    %v1129 = vld [vmem:[#allocation3 + $0x20] sm:$0xff]
    %v1130 = vld [vmem:[#allocation3 + $0x28] sm:$0xff]
    %v1131 = vld [vmem:[#allocation3 + $0x30] sm:$0xff]
    %v1132 = vld [vmem:[#allocation3 + $0x38] sm:$0xff]
    %v1133 = vld [vmem:[#allocation3 + $0x40] sm:$0xff]
    %v1134 = vld [vmem:[#allocation3 + $0x48] sm:$0xff]
    %v1135 = vld [vmem:[#allocation3 + $0x50] sm:$0xff]
    %v1136 = vld [vmem:[#allocation3 + $0x58] sm:$0xff]
    %v1137 = vld [vmem:[#allocation3 + $0x60] sm:$0xff]
    %v1138 = vld [vmem:[#allocation3 + $0x68] sm:$0xff]
    %v1139 = vld [vmem:[#allocation3 + $0x70] sm:$0xff]
    %v1140 = vld [vmem:[#allocation3 + $0x78] sm:$0xff]
    %1141 = vadd.xlane.f32.xlu0 %v1125
    %v1142 = vpop.xlane.xlu0 %1141
    %1143 = vadd.xlane.f32.xlu0 %v1126
    %v1144 = vpop.xlane.xlu0 %1143
    %1145 = vadd.xlane.f32.xlu0 %v1127
    %v1146 = vpop.xlane.xlu0 %1145
    %1147 = vadd.xlane.f32.xlu0 %v1128
    %v1148 = vpop.xlane.xlu0 %1147
    %1149 = vadd.xlane.f32.xlu0 %v1129
    %v1150 = vpop.xlane.xlu0 %1149
    %1151 = vadd.xlane.f32.xlu0 %v1130
    %v1152 = vpop.xlane.xlu0 %1151
    %1153 = vadd.xlane.f32.xlu0 %v1131
    %v1154 = vpop.xlane.xlu0 %1153
    %1155 = vadd.xlane.f32.xlu0 %v1132
    %v1156 = vpop.xlane.xlu0 %1155
    %1157 = vadd.xlane.f32.xlu0 %v1133
    %v1158 = vpop.xlane.xlu0 %1157
    %1159 = vadd.xlane.f32.xlu0 %v1134
    %v1160 = vpop.xlane.xlu0 %1159
    %1161 = vadd.xlane.f32.xlu0 %v1135
    %v1162 = vpop.xlane.xlu0 %1161
    %1163 = vadd.xlane.f32.xlu0 %v1136
    %v1164 = vpop.xlane.xlu0 %1163
    %1165 = vadd.xlane.f32.xlu0 %v1137
    %v1166 = vpop.xlane.xlu0 %1165
    %1167 = vadd.xlane.f32.xlu0 %v1138
    %v1168 = vpop.xlane.xlu0 %1167
    %1169 = vadd.xlane.f32.xlu0 %v1139
    %v1170 = vpop.xlane.xlu0 %1169
    %1171 = vadd.xlane.f32.xlu0 %v1140
    %v1172 = vpop.xlane.xlu0 %1171
    %vm1173 = vcmp.gt.f32.partialorder %v1094, 0.0
    %vm1174 = vcmp.gt.f32.partialorder %v1096, 0.0
    %vm1175 = vcmp.gt.f32.partialorder %v1098, 0.0
    %vm1176 = vcmp.gt.f32.partialorder %v1100, 0.0
    %vm1177 = vcmp.gt.f32.partialorder %v1102, 0.0
    %vm1178 = vcmp.gt.f32.partialorder %v1104, 0.0
    %vm1179 = vcmp.gt.f32.partialorder %v1106, 0.0
    %vm1180 = vcmp.gt.f32.partialorder %v1108, 0.0
    %vm1181 = vcmp.gt.f32.partialorder %v1110, 0.0
    %vm1182 = vcmp.gt.f32.partialorder %v1112, 0.0
    %vm1183 = vcmp.gt.f32.partialorder %v1114, 0.0
    %vm1184 = vcmp.gt.f32.partialorder %v1116, 0.0
    %vm1185 = vcmp.gt.f32.partialorder %v1118, 0.0
    %vm1186 = vcmp.gt.f32.partialorder %v1120, 0.0
    %vm1187 = vcmp.gt.f32.partialorder %v1122, 0.0
    %vm1188 = vcmp.gt.f32.partialorder %v1124, 0.0
    %v1189 = vsel %vm1173, %v1094, 1.0
    %v1190 = vsel %vm1174, %v1096, 1.0
    %v1191 = vsel %vm1175, %v1098, 1.0
    %v1192 = vsel %vm1176, %v1100, 1.0
    %v1193 = vsel %vm1177, %v1102, 1.0
    %v1194 = vsel %vm1178, %v1104, 1.0
    %v1195 = vsel %vm1179, %v1106, 1.0
    %v1196 = vsel %vm1180, %v1108, 1.0
    %v1197 = vsel %vm1181, %v1110, 1.0
    %v1198 = vsel %vm1182, %v1112, 1.0
    %v1199 = vsel %vm1183, %v1114, 1.0
    %v1200 = vsel %vm1184, %v1116, 1.0
    %v1201 = vsel %vm1185, %v1118, 1.0
    %v1202 = vsel %vm1186, %v1120, 1.0
    %v1203 = vsel %vm1187, %v1122, 1.0
    %v1204 = vsel %vm1188, %v1124, 1.0
    %v1205 = vrcp.pop %v1189
    %v1206 = vmul.f32 %v1142, %v1205
    %v1207 = vrcp.pop %v1190
    %v1208 = vmul.f32 %v1144, %v1207
    %v1209 = vrcp.pop %v1191
    %v1210 = vmul.f32 %v1146, %v1209
    %v1211 = vrcp.pop %v1192
    %v1212 = vmul.f32 %v1148, %v1211
    %v1213 = vrcp.pop %v1193
    %v1214 = vmul.f32 %v1150, %v1213
    %v1215 = vrcp.pop %v1194
    %v1216 = vmul.f32 %v1152, %v1215
    %v1217 = vrcp.pop %v1195
    %v1218 = vmul.f32 %v1154, %v1217
    %v1219 = vrcp.pop %v1196
    %v1220 = vmul.f32 %v1156, %v1219
    %v1221 = vrcp.pop %v1197
    %v1222 = vmul.f32 %v1158, %v1221
    %v1223 = vrcp.pop %v1198
    %v1224 = vmul.f32 %v1160, %v1223
    %v1225 = vrcp.pop %v1199
    %v1226 = vmul.f32 %v1162, %v1225
    %v1227 = vrcp.pop %v1200
    %v1228 = vmul.f32 %v1164, %v1227
    %v1229 = vrcp.pop %v1201
    %v1230 = vmul.f32 %v1166, %v1229
    %v1231 = vrcp.pop %v1202
    %v1232 = vmul.f32 %v1168, %v1231
    %v1233 = vrcp.pop %v1203
    %v1234 = vmul.f32 %v1170, %v1233
    %v1235 = vrcp.pop %v1204
    %v1236 = vmul.f32 %v1172, %v1235
    %v1237 = vlaneseq
    %v1238 = vshrl.u32 %v1237, 7
    %v1239 = vadd.s32 %v1238, 8
    %v1240 = vadd.s32 %v1238, 16
    %v1241 = vadd.s32 %v1238, 24
    %v1242 = vadd.s32 %v1238, 32
    %v1243 = vadd.s32 %v1238, 40
    %v1244 = vadd.s32 %v1238, 48
    %v1245 = vadd.s32 %v1238, 56
    %v1246 = vadd.s32 %v1238, 64
    %v1247 = vadd.s32 %v1238, 72
    %v1248 = vadd.s32 %v1238, 80
    %v1249 = vadd.s32 %v1238, 88
    %v1250 = vadd.s32 %v1238, 96
    %v1251 = vadd.s32 %v1238, 104
    %v1252 = vadd.s32 %v1238, 112
    %v1253 = vadd.s32 %v1238, 120
    %v1254 = vstv %s380
    %v1255 = vadd.s32 %v1254, %v1238
    %v1256 = vadd.s32 %v1254, %v1239
    %v1257 = vadd.s32 %v1254, %v1240
    %v1258 = vadd.s32 %v1254, %v1241
    %v1259 = vadd.s32 %v1254, %v1242
    %v1260 = vadd.s32 %v1254, %v1243
    %v1261 = vadd.s32 %v1254, %v1244
    %v1262 = vadd.s32 %v1254, %v1245
    %v1263 = vadd.s32 %v1254, %v1246
    %v1264 = vadd.s32 %v1254, %v1247
    %v1265 = vadd.s32 %v1254, %v1248
    %v1266 = vadd.s32 %v1254, %v1249
    %v1267 = vadd.s32 %v1254, %v1250
    %v1268 = vadd.s32 %v1254, %v1251
    %v1269 = vadd.s32 %v1254, %v1252
    %v1270 = vadd.s32 %v1254, %v1253
    %vm1271 = vcmp.lt.s32.totalorder %v1255, 8
    %vm1272 = vcmp.lt.s32.totalorder %v1256, 8
    %vm1273 = vcmp.lt.s32.totalorder %v1257, 8
    %vm1274 = vcmp.lt.s32.totalorder %v1258, 8
    %vm1275 = vcmp.lt.s32.totalorder %v1259, 8
    %vm1276 = vcmp.lt.s32.totalorder %v1260, 8
    %vm1277 = vcmp.lt.s32.totalorder %v1261, 8
    %vm1278 = vcmp.lt.s32.totalorder %v1262, 8
    %vm1279 = vcmp.lt.s32.totalorder %v1263, 8
    %vm1280 = vcmp.lt.s32.totalorder %v1264, 8
    %vm1281 = vcmp.lt.s32.totalorder %v1265, 8
    %vm1282 = vcmp.lt.s32.totalorder %v1266, 8
    %vm1283 = vcmp.lt.s32.totalorder %v1267, 8
    %vm1284 = vcmp.lt.s32.totalorder %v1268, 8
    %vm1285 = vcmp.lt.s32.totalorder %v1269, 8
    %vm1286 = vcmp.lt.s32.totalorder %v1270, 8
    %vm1287 = vmand %vm1173, %vm1271
    %vm1288 = vmand %vm1174, %vm1272
    %vm1289 = vmand %vm1175, %vm1273
    %vm1290 = vmand %vm1176, %vm1274
    %vm1291 = vmand %vm1177, %vm1275
    %vm1292 = vmand %vm1178, %vm1276
    %vm1293 = vmand %vm1179, %vm1277
    %vm1294 = vmand %vm1180, %vm1278
    %vm1295 = vmand %vm1181, %vm1279
    %vm1296 = vmand %vm1182, %vm1280
    %vm1297 = vmand %vm1183, %vm1281
    %vm1298 = vmand %vm1184, %vm1282
    %vm1299 = vmand %vm1185, %vm1283
    %vm1300 = vmand %vm1186, %vm1284
    %vm1301 = vmand %vm1187, %vm1285
    %vm1302 = vmand %vm1188, %vm1286
    %v1303 = vsub.f32 %v1061, %v1206
    %v1304 = vsub.f32 %v1062, %v1208
    %v1305 = vsub.f32 %v1063, %v1210
    %v1306 = vsub.f32 %v1064, %v1212
    %v1307 = vsub.f32 %v1065, %v1214
    %v1308 = vsub.f32 %v1066, %v1216
    %v1309 = vsub.f32 %v1067, %v1218
    %v1310 = vsub.f32 %v1068, %v1220
    %v1311 = vsub.f32 %v1069, %v1222
    %v1312 = vsub.f32 %v1070, %v1224
    %v1313 = vsub.f32 %v1071, %v1226
    %v1314 = vsub.f32 %v1072, %v1228
    %v1315 = vsub.f32 %v1073, %v1230
    %v1316 = vsub.f32 %v1074, %v1232
    %v1317 = vsub.f32 %v1075, %v1234
    %v1318 = vsub.f32 %v1076, %v1236
    %v1319 = vsel %vm1287, %v1303, 0.0
    %v1320 = vsel %vm1288, %v1304, 0.0
    %v1321 = vsel %vm1289, %v1305, 0.0
    %v1322 = vsel %vm1290, %v1306, 0.0
    %v1323 = vsel %vm1291, %v1307, 0.0
    %v1324 = vsel %vm1292, %v1308, 0.0
    %v1325 = vsel %vm1293, %v1309, 0.0
    %v1326 = vsel %vm1294, %v1310, 0.0
    %v1327 = vsel %vm1295, %v1311, 0.0
    %v1328 = vsel %vm1296, %v1312, 0.0
    %v1329 = vsel %vm1297, %v1313, 0.0
    %v1330 = vsel %vm1298, %v1314, 0.0
    %v1331 = vsel %vm1299, %v1315, 0.0
    %v1332 = vsel %vm1300, %v1316, 0.0
    %v1333 = vsel %vm1301, %v1317, 0.0
    %v1334 = vsel %vm1302, %v1318, 0.0
    %vm1335 = vcmask 7168
    %1336 = vst.msk [vmem:[%s4] sm:$0xff] %vm1335, %v1319
    %1337 = vst.msk [vmem:[%s4 + $0x8] sm:$0xff] %vm1335, %v1320
    %1338 = vst.msk [vmem:[%s4 + $0x10] sm:$0xff] %vm1335, %v1321
    %1339 = vst.msk [vmem:[%s4 + $0x18] sm:$0xff] %vm1335, %v1322
    %1340 = vst.msk [vmem:[%s4 + $0x20] sm:$0xff] %vm1335, %v1323
    %1341 = vst.msk [vmem:[%s4 + $0x28] sm:$0xff] %vm1335, %v1324
    %1342 = vst.msk [vmem:[%s4 + $0x30] sm:$0xff] %vm1335, %v1325
    %1343 = vst.msk [vmem:[%s4 + $0x38] sm:$0xff] %vm1335, %v1326
    %1344 = vst.msk [vmem:[%s4 + $0x40] sm:$0xff] %vm1335, %v1327
    %1345 = vst.msk [vmem:[%s4 + $0x48] sm:$0xff] %vm1335, %v1328
    %1346 = vst.msk [vmem:[%s4 + $0x50] sm:$0xff] %vm1335, %v1329
    %1347 = vst.msk [vmem:[%s4 + $0x58] sm:$0xff] %vm1335, %v1330
    %1348 = vst.msk [vmem:[%s4 + $0x60] sm:$0xff] %vm1335, %v1331
    %1349 = vst.msk [vmem:[%s4 + $0x68] sm:$0xff] %vm1335, %v1332
    %1350 = vst.msk [vmem:[%s4 + $0x70] sm:$0xff] %vm1335, %v1333
    %1351 = vst.msk [vmem:[%s4 + $0x78] sm:$0xff] %vm1335, %v1334
  $region33: #{tpu_custom_call.1} parent=0 // pred_fallthru
    _
  // Predicated region
  $region34: #{tpu_custom_call.1} parent=0 // pred_check
    _
  $region35: #{tpu_custom_call.1} parent=0 // pred_check_branch
    %1353 = sbr.rel (0) target = $region37
  $region36: #{tpu_custom_call.1} parent=0 // pred_region
    _
  $region37: #{tpu_custom_call.1} parent=0 // pred_fallthru
    _
  // Predicated region
  $region38: #{tpu_custom_call.1} parent=0 // pred_check
    _
  $region39: #{tpu_custom_call.1} parent=0 // pred_check_branch
    %1355 = sbr.rel (0) target = $region41
  $region40: #{tpu_custom_call.1} parent=0 // pred_region
    _
  $region41: #{tpu_custom_call.1} parent=0 // pred_fallthru
    _

</llo_original>
